<compile_context>
chip_gen: v7x
topology: tpu7x:2x2x1
jax: 0.10.0
libtpu: 0.0.40
codegen_flags: <defaults>
</compile_context>

<pallas_src>
import jax
import jax.numpy as jnp
import numpy as np
from jax.experimental import pallas as pl
from jax.experimental.pallas import tpu as pltpu

NUM_CLASSES = 64
H = 7          # real spatial extent (module does x.view(-1, 1, 7, 1))
H_PAD = 8      # padded spatial extent (lane density; padded row stays exactly 0)
EPS = 1e-5     # PyTorch BatchNorm default eps


def _round_up(n, m):
    return ((n + m - 1) // m) * m


# --------------------------------------------------------------------------- #
# Pallas kernel: 5 matmuls (3 banded convs + 2 FCs); BN folded host-side.     #
# --------------------------------------------------------------------------- #
def cnn_kernel(x_ref, w1_ref, w2_ref, w3_ref, wf1_ref, wf2_ref, bias_ref, out_ref):
    bias = bias_ref[...]  # (8, 1024) f32; rows 0..4 hold the per-layer biases

    def dense(h, w_ref, row, width, relu):
        y = jnp.dot(h.astype(jnp.bfloat16), w_ref[...],
                    preferred_element_type=jnp.float32)
        y = y + bias[row:row + 1, :width]           # broadcast over batch rows
        return jnp.maximum(y, 0.0) if relu else y

    h = x_ref[...]                                   # (Bt, 8)    f32
    h = dense(h, w1_ref, 0, H_PAD * 32, True)        # (Bt, 256)  conv1 + BN + ReLU
    h = dense(h, w2_ref, 1, H_PAD * 64, True)        # (Bt, 512)  conv2 + BN + ReLU
    h = dense(h, w3_ref, 2, H_PAD * 128, True)       # (Bt, 1024) conv3 + BN + ReLU
    h = dense(h, wf1_ref, 3, 128, True)              # (Bt, 128)  fc1 + BN1d + ReLU
    # TODO(synk): Dropout(0.5) is identity in eval mode; training-mode RNG mask omitted.
    out_ref[...] = dense(h, wf2_ref, 4, 128, False)  # (Bt, 128)  fc2 (cols 64..127 are 0)


def cnn_forward(x, kparams):
    """x: anything reshapeable to (B, 7) -> (B, NUM_CLASSES) float32."""
    w1, w2, w3, wf1, wf2, bias_slab = kparams
    x2 = x.reshape(-1, H).astype(jnp.float32)
    B = x2.shape[0]

    B_TILE = min(512, _round_up(B, 8))
    B_pad = _round_up(B, B_TILE)
    xp = jnp.zeros((B_pad, H_PAD), jnp.float32).at[:B, :H].set(x2)

    const2 = lambda i: (0, 0)   # weights/biases: same full block every grid step
    out = pl.pallas_call(
        cnn_kernel,
        out_shape=jax.ShapeDtypeStruct((B_pad, 128), jnp.float32),
        grid=(B_pad // B_TILE,),
        in_specs=[
            pl.BlockSpec((B_TILE, H_PAD), lambda i: (i, 0)),
            pl.BlockSpec(w1.shape, const2),
            pl.BlockSpec(w2.shape, const2),
            pl.BlockSpec(w3.shape, const2),
            pl.BlockSpec(wf1.shape, const2),
            pl.BlockSpec(wf2.shape, const2),
            pl.BlockSpec(bias_slab.shape, const2),
        ],
        out_specs=pl.BlockSpec((B_TILE, 128), lambda i: (i, 0)),
        compiler_params=pltpu.CompilerParams(
            dimension_semantics=("parallel",)),
    )(xp, w1, w2, w3, wf1, wf2, bias_slab)
    return out[:B, :NUM_CLASSES]


# --------------------------------------------------------------------------- #
# Host-side parameter prep: fold BN, build block-banded conv weights, pack.   #
# --------------------------------------------------------------------------- #
def make_raw_params(key):
    """Deterministic synthetic parameters in PyTorch shapes (the 'spec' layout)."""
    ks = iter(jax.random.split(key, 32))

    def conv(cin, cout):
        w = jax.random.normal(next(ks), (cout, cin, 3, 1), jnp.float32) / np.sqrt(3 * cin)
        b = 0.1 * jax.random.normal(next(ks), (cout,), jnp.float32)
        g = 1.0 + 0.1 * jax.random.normal(next(ks), (cout,), jnp.float32)
        beta = 0.1 * jax.random.normal(next(ks), (cout,), jnp.float32)
        mean = 0.1 * jax.random.normal(next(ks), (cout,), jnp.float32)
        var = jax.random.uniform(next(ks), (cout,), jnp.float32, minval=0.5, maxval=1.5)
        return (w, b, g, beta, mean, var)

    convs = [conv(1, 32), conv(32, 64), conv(64, 128)]

    wf1 = jax.random.normal(next(ks), (64, 128 * H), jnp.float32) / np.sqrt(128 * H)
    bf1 = 0.1 * jax.random.normal(next(ks), (64,), jnp.float32)
    gf = 1.0 + 0.1 * jax.random.normal(next(ks), (64,), jnp.float32)
    bef = 0.1 * jax.random.normal(next(ks), (64,), jnp.float32)
    mf = 0.1 * jax.random.normal(next(ks), (64,), jnp.float32)
    vf = jax.random.uniform(next(ks), (64,), jnp.float32, minval=0.5, maxval=1.5)

    wf2 = jax.random.normal(next(ks), (NUM_CLASSES, 64), jnp.float32) / np.sqrt(64)
    bf2 = 0.1 * jax.random.normal(next(ks), (NUM_CLASSES,), jnp.float32)

    return {"conv": convs, "fc1": (wf1, bf1, gf, bef, mf, vf), "fc2": (wf2, bf2)}


def build_kernel_params(raw):
    """Fold BN and build banded/padded weights + a single packed bias slab."""
    conv_specs = [(1, 32), (32, 64), (64, 128)]
    weights = []
    bias_slab = np.zeros((8, H_PAD * 128), np.float32)  # (8, 1024): rows 0..4 used

    for li, (cin, cout) in enumerate(conv_specs):
        w_pt, b, g, beta, mean, var = [np.asarray(a) for a in raw["conv"][li]]
        scale = g / np.sqrt(var + EPS)
        # (cout, cin, 3, 1) -> (3, cin, cout), fold BN scale on output channels.
        w_k = np.transpose(w_pt[:, :, :, 0], (2, 1, 0)) * scale[None, None, :]
        b_fold = (b - mean) * scale + beta
        # Block-banded weight encoding conv(k=3, stride=1, pad=1) along the H axis.
        Wb = np.zeros((H_PAD * cin, H_PAD * cout), np.float32)
        for h_out in range(H):
            for k in range(3):
                h_in = h_out + k - 1
                if 0 <= h_in < H:
                    Wb[h_in * cin:(h_in + 1) * cin,
                       h_out * cout:(h_out + 1) * cout] = w_k[k]
        weights.append(Wb)
        for hh in range(H):  # padded spatial block (h=7) keeps zero bias -> stays zero
            bias_slab[li, hh * cout:(hh + 1) * cout] = b_fold

    # fc1: PyTorch Linear(128*7, 64); torch flatten order is (c, h), kernel flatten is (h, c).
    wf1, bf1, gf, bef, mf, vf = [np.asarray(a) for a in raw["fc1"]]
    scale_f = gf / np.sqrt(vf + EPS)
    w = wf1.reshape(64, 128, H) * scale_f[:, None, None]          # [out, c, h], BN folded
    Wf1 = np.zeros((H_PAD * 128, 128), np.float32)
    Wf1[:H * 128, :64] = np.transpose(w, (2, 1, 0)).reshape(H * 128, 64)
    bias_slab[3, :64] = (bf1 - mf) * scale_f + bef
    weights.append(Wf1)

    # fc2: pad to a lane-dense 128x128 (extra rows/cols are zero).
    wf2, bf2 = [np.asarray(a) for a in raw["fc2"]]
    Wf2 = np.zeros((128, 128), np.float32)
    Wf2[:64, :NUM_CLASSES] = wf2.T
    bias_slab[4, :NUM_CLASSES] = bf2
    weights.append(Wf2)

    weights_bf16 = tuple(jnp.asarray(w, jnp.bfloat16) for w in weights)
    return weights_bf16 + (jnp.asarray(bias_slab),)


# --------------------------------------------------------------------------- #
# Pure-JAX f32 reference with the ORIGINAL (unfolded) PyTorch semantics.      #
# --------------------------------------------------------------------------- #
def reference_forward(x, raw):
    B = x.reshape(-1, H).shape[0]
    h = x.reshape(B, H, 1).astype(jnp.float32)  # channels-last (B, H, Cin)
    for li in range(3):
        w_pt, b, g, beta, mean, var = raw["conv"][li]
        cout = w_pt.shape[0]
        w_k = jnp.transpose(w_pt[:, :, :, 0], (2, 1, 0))  # (3, cin, cout)
        hp = jnp.pad(h, ((0, 0), (1, 1), (0, 0)))
        y = jnp.zeros((B, H, cout), jnp.float32) + b.reshape(1, 1, cout)
        for k in range(3):
            y = y + jnp.einsum("bhc,cd->bhd", hp[:, k:k + H, :], w_k[k])
        scale = (g * jax.lax.rsqrt(var + EPS)).reshape(1, 1, cout)
        y = (y - mean.reshape(1, 1, cout)) * scale + beta.reshape(1, 1, cout)
        h = jnp.maximum(y, 0.0)
    flat = jnp.transpose(h, (0, 2, 1)).reshape(B, 128 * H)  # PyTorch (c, h) flatten
    wf1, bf1, gf, bef, mf, vf = raw["fc1"]
    y = flat @ wf1.T + bf1
    y = (y - mf) * (gf * jax.lax.rsqrt(vf + EPS)) + bef
    y = jnp.maximum(y, 0.0)
    wf2, bf2 = raw["fc2"]
    return y @ wf2.T + bf2


if __name__ == "__main__":
    B = 8
    key = jax.random.PRNGKey(0)
    k_x, k_p = jax.random.split(key)

    # Module does x.view(-1, 1, 7, 1): each example is a 7-element vector.
    x = jax.random.normal(k_x, (B, H), dtype=jnp.float32)

    raw = make_raw_params(k_p)
    kparams = build_kernel_params(raw)

    out = jax.block_until_ready(cnn_forward(x, kparams))
    ref = jax.block_until_ready(reference_forward(x, raw))

    assert out.shape == (B, NUM_CLASSES), out.shape
    # Kernel uses bf16 matmul inputs (f32 accumulation); compare vs f32 reference.
    np.testing.assert_allclose(np.asarray(out), np.asarray(ref), rtol=3e-2, atol=3e-2)
    print("KERNEL_OK")
</pallas_src>

<mosaic_0001>
module attributes {stable_mosaic.version = 11 : i64} {
  func.func @cnn_kernel(%arg0: i32, %arg1: memref<8x8xf32, #tpu.memory_space<vmem>>, %arg2: memref<8x256xbf16, #tpu.memory_space<vmem>>, %arg3: memref<256x512xbf16, #tpu.memory_space<vmem>>, %arg4: memref<512x1024xbf16, #tpu.memory_space<vmem>>, %arg5: memref<1024x128xbf16, #tpu.memory_space<vmem>>, %arg6: memref<128x128xbf16, #tpu.memory_space<vmem>>, %arg7: memref<8x1024xf32, #tpu.memory_space<vmem>>, %arg8: memref<8x128xf32, #tpu.memory_space<vmem>>) attributes {dimension_semantics = [#tpu.dimension_semantics<parallel>], iteration_bounds = array<i64: 1>, scalar_prefetch = 0 : i64, scratch_operands = 0 : i64, tpu.core_type = #tpu.core_type<tc>, window_params = [{transform_indices = @transform_0, window_bounds = array<i64: 8, 8>}, {pipeline_mode = #tpu.pipeline_mode<synchronous>, transform_indices = @transform_1, window_bounds = array<i64: 8, 256>}, {pipeline_mode = #tpu.pipeline_mode<synchronous>, transform_indices = @transform_2, window_bounds = array<i64: 256, 512>}, {pipeline_mode = #tpu.pipeline_mode<synchronous>, transform_indices = @transform_3, window_bounds = array<i64: 512, 1024>}, {pipeline_mode = #tpu.pipeline_mode<synchronous>, transform_indices = @transform_4, window_bounds = array<i64: 1024, 128>}, {pipeline_mode = #tpu.pipeline_mode<synchronous>, transform_indices = @transform_5, window_bounds = array<i64: 128, 128>}, {pipeline_mode = #tpu.pipeline_mode<synchronous>, transform_indices = @transform_6, window_bounds = array<i64: 8, 1024>}, {transform_indices = @transform_7, window_bounds = array<i64: 8, 128>}]} {
    %c0 = arith.constant 0 : index
    %c0_0 = arith.constant 0 : index
    %0 = vector.load %arg7[%c0, %c0_0] : memref<8x1024xf32, #tpu.memory_space<vmem>>, vector<8x1024xf32>
    %c0_1 = arith.constant 0 : index
    %c0_2 = arith.constant 0 : index
    %1 = vector.load %arg1[%c0_1, %c0_2] : memref<8x8xf32, #tpu.memory_space<vmem>>, vector<8x8xf32>
    %2 = arith.truncf %1 : vector<8x8xf32> to vector<8x8xbf16>
    %c0_3 = arith.constant 0 : index
    %c0_4 = arith.constant 0 : index
    %3 = vector.load %arg2[%c0_3, %c0_4] : memref<8x256xbf16, #tpu.memory_space<vmem>>, vector<8x256xbf16>
    %cst = arith.constant dense<0.000000e+00> : vector<8x256xf32>
    %4 = tpu.matmul %2, %3, %cst {dimension_numbers = #tpu.dot_dimension_numbers<[1], [0], [0], [1], [0, 0, 1, 1], [], []>} : vector<8x8xbf16>, vector<8x256xbf16>, vector<8x256xf32> -> vector<8x256xf32>
    %5 = vector.extract_strided_slice %0 {offsets = [0, 0], sizes = [1, 256], strides = [1, 1]} : vector<8x1024xf32> to vector<1x256xf32>
    %6 = vector.broadcast %5 : vector<1x256xf32> to vector<8x256xf32>
    %7 = arith.addf %4, %6 : vector<8x256xf32>
    %cst_5 = arith.constant 0.000000e+00 : f32
    %8 = vector.broadcast %cst_5 : f32 to vector<8x256xf32>
    %9 = arith.maximumf %7, %8 : vector<8x256xf32>
    %10 = arith.truncf %9 : vector<8x256xf32> to vector<8x256xbf16>
    %c0_6 = arith.constant 0 : index
    %c0_7 = arith.constant 0 : index
    %11 = vector.load %arg3[%c0_6, %c0_7] : memref<256x512xbf16, #tpu.memory_space<vmem>>, vector<256x512xbf16>
    %cst_8 = arith.constant dense<0.000000e+00> : vector<8x512xf32>
    %12 = tpu.matmul %10, %11, %cst_8 {dimension_numbers = #tpu.dot_dimension_numbers<[1], [0], [0], [1], [0, 0, 1, 1], [], []>} : vector<8x256xbf16>, vector<256x512xbf16>, vector<8x512xf32> -> vector<8x512xf32>
    %13 = vector.extract_strided_slice %0 {offsets = [1, 0], sizes = [1, 512], strides = [1, 1]} : vector<8x1024xf32> to vector<1x512xf32>
    %14 = vector.broadcast %13 : vector<1x512xf32> to vector<8x512xf32>
    %15 = arith.addf %12, %14 : vector<8x512xf32>
    %cst_9 = arith.constant 0.000000e+00 : f32
    %16 = vector.broadcast %cst_9 : f32 to vector<8x512xf32>
    %17 = arith.maximumf %15, %16 : vector<8x512xf32>
    %18 = arith.truncf %17 : vector<8x512xf32> to vector<8x512xbf16>
    %c0_10 = arith.constant 0 : index
    %c0_11 = arith.constant 0 : index
    %19 = vector.load %arg4[%c0_10, %c0_11] : memref<512x1024xbf16, #tpu.memory_space<vmem>>, vector<512x1024xbf16>
    %cst_12 = arith.constant dense<0.000000e+00> : vector<8x1024xf32>
    %20 = tpu.matmul %18, %19, %cst_12 {dimension_numbers = #tpu.dot_dimension_numbers<[1], [0], [0], [1], [0, 0, 1, 1], [], []>} : vector<8x512xbf16>, vector<512x1024xbf16>, vector<8x1024xf32> -> vector<8x1024xf32>
    %21 = vector.extract_strided_slice %0 {offsets = [2, 0], sizes = [1, 1024], strides = [1, 1]} : vector<8x1024xf32> to vector<1x1024xf32>
    %22 = vector.broadcast %21 : vector<1x1024xf32> to vector<8x1024xf32>
    %23 = arith.addf %20, %22 : vector<8x1024xf32>
    %cst_13 = arith.constant 0.000000e+00 : f32
    %24 = vector.broadcast %cst_13 : f32 to vector<8x1024xf32>
    %25 = arith.maximumf %23, %24 : vector<8x1024xf32>
    %26 = arith.truncf %25 : vector<8x1024xf32> to vector<8x1024xbf16>
    %c0_14 = arith.constant 0 : index
    %c0_15 = arith.constant 0 : index
    %27 = vector.load %arg5[%c0_14, %c0_15] : memref<1024x128xbf16, #tpu.memory_space<vmem>>, vector<1024x128xbf16>
    %cst_16 = arith.constant dense<0.000000e+00> : vector<8x128xf32>
    %28 = tpu.matmul %26, %27, %cst_16 {dimension_numbers = #tpu.dot_dimension_numbers<[1], [0], [0], [1], [0, 0, 1, 1], [], []>} : vector<8x1024xbf16>, vector<1024x128xbf16>, vector<8x128xf32> -> vector<8x128xf32>
    %29 = vector.extract_strided_slice %0 {offsets = [3, 0], sizes = [1, 128], strides = [1, 1]} : vector<8x1024xf32> to vector<1x128xf32>
    %30 = vector.broadcast %29 : vector<1x128xf32> to vector<8x128xf32>
    %31 = arith.addf %28, %30 : vector<8x128xf32>
    %cst_17 = arith.constant 0.000000e+00 : f32
    %32 = vector.broadcast %cst_17 : f32 to vector<8x128xf32>
    %33 = arith.maximumf %31, %32 : vector<8x128xf32>
    %34 = arith.truncf %33 : vector<8x128xf32> to vector<8x128xbf16>
    %c0_18 = arith.constant 0 : index
    %c0_19 = arith.constant 0 : index
    %35 = vector.load %arg6[%c0_18, %c0_19] : memref<128x128xbf16, #tpu.memory_space<vmem>>, vector<128x128xbf16>
    %cst_20 = arith.constant dense<0.000000e+00> : vector<8x128xf32>
    %36 = tpu.matmul %34, %35, %cst_20 {dimension_numbers = #tpu.dot_dimension_numbers<[1], [0], [0], [1], [0, 0, 1, 1], [], []>} : vector<8x128xbf16>, vector<128x128xbf16>, vector<8x128xf32> -> vector<8x128xf32>
    %37 = vector.extract_strided_slice %0 {offsets = [4, 0], sizes = [1, 128], strides = [1, 1]} : vector<8x1024xf32> to vector<1x128xf32>
    %38 = vector.broadcast %37 : vector<1x128xf32> to vector<8x128xf32>
    %39 = arith.addf %36, %38 : vector<8x128xf32>
    %c0_21 = arith.constant 0 : index
    %c0_22 = arith.constant 0 : index
    %40 = vector.load %arg8[%c0_21, %c0_22] : memref<8x128xf32, #tpu.memory_space<vmem>>, vector<8x128xf32>
    tpu.vector_store %arg8[%c0_21, %c0_22], %39 {strides = array<i32>} : memref<8x128xf32, #tpu.memory_space<vmem>>, vector<8x128xf32>,
    return
  }
  func.func @transform_0(%arg0: i32) -> (i32, i32) {
    %c0_i32 = arith.constant 0 : i32
    %c0_i32_0 = arith.constant 0 : i32
    return %arg0, %c0_i32 : i32, i32
  }
  func.func @transform_1(%arg0: i32) -> (i32, i32) {
    %c0_i32 = arith.constant 0 : i32
    %c0_i32_0 = arith.constant 0 : i32
    %c0_i32_1 = arith.constant 0 : i32
    return %c0_i32, %c0_i32_0 : i32, i32
  }
  func.func @transform_2(%arg0: i32) -> (i32, i32) {
    %c0_i32 = arith.constant 0 : i32
    %c0_i32_0 = arith.constant 0 : i32
    %c0_i32_1 = arith.constant 0 : i32
    return %c0_i32, %c0_i32_0 : i32, i32
  }
  func.func @transform_3(%arg0: i32) -> (i32, i32) {
    %c0_i32 = arith.constant 0 : i32
    %c0_i32_0 = arith.constant 0 : i32
    %c0_i32_1 = arith.constant 0 : i32
    return %c0_i32, %c0_i32_0 : i32, i32
  }
  func.func @transform_4(%arg0: i32) -> (i32, i32) {
    %c0_i32 = arith.constant 0 : i32
    %c0_i32_0 = arith.constant 0 : i32
    %c0_i32_1 = arith.constant 0 : i32
    return %c0_i32, %c0_i32_0 : i32, i32
  }
  func.func @transform_5(%arg0: i32) -> (i32, i32) {
    %c0_i32 = arith.constant 0 : i32
    %c0_i32_0 = arith.constant 0 : i32
    %c0_i32_1 = arith.constant 0 : i32
    return %c0_i32, %c0_i32_0 : i32, i32
  }
  func.func @transform_6(%arg0: i32) -> (i32, i32) {
    %c0_i32 = arith.constant 0 : i32
    %c0_i32_0 = arith.constant 0 : i32
    %c0_i32_1 = arith.constant 0 : i32
    return %c0_i32, %c0_i32_0 : i32, i32
  }
  func.func @transform_7(%arg0: i32) -> (i32, i32) {
    %c0_i32 = arith.constant 0 : i32
    %c0_i32_0 = arith.constant 0 : i32
    return %arg0, %c0_i32 : i32, i32
  }
}

</mosaic_0001>

<llo_original>
// kernel: tpu_custom_call.1
$region0: #{tpu_custom_call.1}
  #allocation0 [shape = 'u32[]', space=smem, size = 0x4, offset = 0x4, fixed_abs, tag = 'smem constant byte address 0x4 - core index']
  #allocation1 [shape = 'u32[144,128]{1,0:T(1,128)}', space=vmem, size = 0x12000, scoped, tag = 'internal scratch']
  %s0 = inlined_call_operand.hbm [shape: f32[8,8], index: 0, kind: input, shape index: {}]
  %s1 = inlined_call_operand.hbm [shape: bf16[8,256], index: 1, kind: input, shape index: {}]
  %s2 = inlined_call_operand.hbm [shape: bf16[256,512], index: 2, kind: input, shape index: {}]
  %s3 = inlined_call_operand.hbm [shape: bf16[512,1024], index: 3, kind: input, shape index: {}]
  %s4 = inlined_call_operand.hbm [shape: bf16[1024,128], index: 4, kind: input, shape index: {}]
  %s5 = inlined_call_operand.hbm [shape: bf16[128,128], index: 5, kind: input, shape index: {}]
  %s6 = inlined_call_operand.hbm [shape: f32[8,1024], index: 6, kind: input, shape index: {}]
  %s7 = inlined_call_operand.hbm [shape: f32[8,128], index: 7, kind: output, shape index: {}]
  %s8 = sld [smem:[#allocation0]]
  $region66: #{tpu_custom_call.1} parent=0
    _
  %s10 = ssub.s32 1, %s8
  %s11 = scalar_select 0, %s10, %s8
  $region1: #{tpu_custom_call.1} parent=0
    #allocation2 [shape = 'u8[4096]{0}', space=vmem, size = 0x1000, scoped, tag = 'input window, operand 0, single buffered']
    #allocation3 [shape = 's32[1]{0}', space=sflag, size = 0x4, scoped, tag = 'scoped memory for tpu_custom_call.1']
    #allocation4 [shape = 's32[1]{0}', space=sflag, size = 0x4, scoped, tag = 'scoped memory for tpu_custom_call.1']
    #allocation5 [shape = 'u8[4096]{0}', space=vmem, size = 0x1000, scoped, tag = 'input window, operand 1, single buffered']
    #allocation6 [shape = 's32[1]{0}', space=sflag, size = 0x4, scoped, tag = 'scoped memory for tpu_custom_call.1']
    #allocation7 [shape = 'u8[262144]{0}', space=vmem, size = 0x40000, scoped, tag = 'input window, operand 2, single buffered']
    #allocation8 [shape = 'u8[1048576]{0}', space=vmem, size = 0x100000, scoped, tag = 'input window, operand 3, single buffered']
    #allocation9 [shape = 's32[1]{0}', space=sflag, size = 0x4, scoped, tag = 'scoped memory for tpu_custom_call.1']
    #allocation10 [shape = 'u8[262144]{0}', space=vmem, size = 0x40000, scoped, tag = 'input window, operand 4, single buffered']
    #allocation11 [shape = 'u8[32768]{0}', space=vmem, size = 0x8000, scoped, tag = 'input window, operand 5, single buffered']
    #allocation12 [shape = 's32[1]{0}', space=sflag, size = 0x4, scoped, tag = 'scoped memory for tpu_custom_call.1']
    #allocation13 [shape = 'u8[32768]{0}', space=vmem, size = 0x8000, scoped, tag = 'input window, operand 6, single buffered']
    #allocation14 [shape = 'u8[4096]{0}', space=vmem, size = 0x1000, scoped, tag = 'output window, operand 0, single buffered']
    %12 = vsyncpa [#allocation3], 0
    %13 = vsyncpa [#allocation6], 0
    %14 = vsyncpa [#allocation9], 0
    %15 = vsyncpa [#allocation12], 0
    %16 = vsyncpa [#allocation4], 0
    // Predicated region
    $region2: #{tpu_custom_call.1} parent=1 // pred_check
      _
    $region3: #{tpu_custom_call.1} parent=1 // pred_check_branch
      %18 = sbr.rel (0) target = $region5
    $region4: #{tpu_custom_call.1} parent=1 // pred_region
      %s20 = ssub.s32 128, 128
      %21 = vsyncadd [#allocation3], %s20
      %s23 = sshll.u32 [#allocation2], 4
      %s24 = int_to_ptr.vmem [resolvable:$true] %s23
      %26 = dma.hbm_to_vmem [thread:$0]  %s0, 128, %s24, [#allocation3]
    $region5: #{tpu_custom_call.1} parent=1 // pred_fallthru
      _
    // Predicated region
    $region6: #{tpu_custom_call.1} parent=1 // pred_check
      _
    $region7: #{tpu_custom_call.1} parent=1 // pred_check_branch
      %28 = sbr.rel (0) target = $region9
    $region8: #{tpu_custom_call.1} parent=1 // pred_region
      %s30 = ssub.s32 128, 128
      %31 = vsyncadd [#allocation6], %s30
      %s33 = sshll.u32 [#allocation5], 4
      %s34 = int_to_ptr.vmem [resolvable:$true] %s33
      %36 = dma.hbm_to_vmem [thread:$0]  %s1, 128, %s34, [#allocation6]
    $region9: #{tpu_custom_call.1} parent=1 // pred_fallthru
      _
    // Predicated region
    $region10: #{tpu_custom_call.1} parent=1 // pred_check
      _
    $region11: #{tpu_custom_call.1} parent=1 // pred_check_branch
      %38 = sbr.rel (0) target = $region13
    $region12: #{tpu_custom_call.1} parent=1 // pred_region
      %s40 = ssub.s32 8192, 8192
      %41 = vsyncadd [#allocation6], %s40
      %s42 = sshll.u32 [#allocation7], 4
      %s43 = int_to_ptr.vmem [resolvable:$true] %s42
      %48 = dma.hbm_to_vmem [thread:$0]  %s2, 8192, %s43, [#allocation6], 256, 256, 16
    $region13: #{tpu_custom_call.1} parent=1 // pred_fallthru
      _
    // Predicated region
    $region14: #{tpu_custom_call.1} parent=1 // pred_check
      _
    $region15: #{tpu_custom_call.1} parent=1 // pred_check_branch
      %50 = sbr.rel (0) target = $region17
    $region16: #{tpu_custom_call.1} parent=1 // pred_region
      %s52 = ssub.s32 32768, 32768
      %53 = vsyncadd [#allocation9], %s52
      %s54 = sshll.u32 [#allocation8], 4
      %s55 = int_to_ptr.vmem [resolvable:$true] %s54
      %60 = dma.hbm_to_vmem [thread:$0]  %s3, 32768, %s55, [#allocation9], 512, 512, 32
    $region17: #{tpu_custom_call.1} parent=1 // pred_fallthru
      _
    // Predicated region
    $region18: #{tpu_custom_call.1} parent=1 // pred_check
      _
    $region19: #{tpu_custom_call.1} parent=1 // pred_check_branch
      %62 = sbr.rel (0) target = $region21
    $region20: #{tpu_custom_call.1} parent=1 // pred_region
      %s64 = ssub.s32 8192, 8192
      %65 = vsyncadd [#allocation9], %s64
      %s66 = sshll.u32 [#allocation10], 4
      %s67 = int_to_ptr.vmem [resolvable:$true] %s66
      %72 = dma.hbm_to_vmem [thread:$0]  %s4, 8192, %s67, [#allocation9], 64, 64, 4
    $region21: #{tpu_custom_call.1} parent=1 // pred_fallthru
      _
    // Predicated region
    $region22: #{tpu_custom_call.1} parent=1 // pred_check
      _
    $region23: #{tpu_custom_call.1} parent=1 // pred_check_branch
      %74 = sbr.rel (0) target = $region25
    $region24: #{tpu_custom_call.1} parent=1 // pred_region
      %s76 = ssub.s32 1024, 1024
      %77 = vsyncadd [#allocation12], %s76
      %s78 = sshll.u32 [#allocation11], 4
      %s79 = int_to_ptr.vmem [resolvable:$true] %s78
      %84 = dma.hbm_to_vmem [thread:$0]  %s5, 1024, %s79, [#allocation12], 64, 64, 4
    $region25: #{tpu_custom_call.1} parent=1 // pred_fallthru
      _
    // Predicated region
    $region26: #{tpu_custom_call.1} parent=1 // pred_check
      _
    $region27: #{tpu_custom_call.1} parent=1 // pred_check_branch
      %86 = sbr.rel (0) target = $region29
    $region28: #{tpu_custom_call.1} parent=1 // pred_region
      %s88 = ssub.s32 1024, 1024
      %89 = vsyncadd [#allocation12], %s88
      %s91 = sshll.u32 [#allocation13], 4
      %s92 = int_to_ptr.vmem [resolvable:$true] %s91
      %94 = dma.hbm_to_vmem [thread:$0]  %s6, 1024, %s92, [#allocation12]
    $region29: #{tpu_custom_call.1} parent=1 // pred_fallthru
      _
    // Predicated region
    $region30: #{tpu_custom_call.1} parent=1 // pred_check
      _
    $region31: #{tpu_custom_call.1} parent=1 // pred_check_branch
      %96 = sbr.rel (0) target = $region33
    $region32: #{tpu_custom_call.1} parent=1 // pred_region
      %97 = dma.done [#allocation3], 128
    $region33: #{tpu_custom_call.1} parent=1 // pred_fallthru
      _
    // Predicated region
    $region34: #{tpu_custom_call.1} parent=1 // pred_check
      _
    $region35: #{tpu_custom_call.1} parent=1 // pred_check_branch
      %99 = sbr.rel (0) target = $region37
    $region36: #{tpu_custom_call.1} parent=1 // pred_region
      %100 = dma.done [#allocation6], 128
    $region37: #{tpu_custom_call.1} parent=1 // pred_fallthru
      _
    // Predicated region
    $region38: #{tpu_custom_call.1} parent=1 // pred_check
      _
    $region39: #{tpu_custom_call.1} parent=1 // pred_check_branch
      %102 = sbr.rel (0) target = $region41
    $region40: #{tpu_custom_call.1} parent=1 // pred_region
      %103 = dma.done [#allocation6], 8192
    $region41: #{tpu_custom_call.1} parent=1 // pred_fallthru
      _
    // Predicated region
    $region42: #{tpu_custom_call.1} parent=1 // pred_check
      _
    $region43: #{tpu_custom_call.1} parent=1 // pred_check_branch
      %105 = sbr.rel (0) target = $region45
    $region44: #{tpu_custom_call.1} parent=1 // pred_region
      %106 = dma.done [#allocation9], 32768
    $region45: #{tpu_custom_call.1} parent=1 // pred_fallthru
      _
    // Predicated region
    $region46: #{tpu_custom_call.1} parent=1 // pred_check
      _
    $region47: #{tpu_custom_call.1} parent=1 // pred_check_branch
      %108 = sbr.rel (0) target = $region49
    $region48: #{tpu_custom_call.1} parent=1 // pred_region
      %109 = dma.done [#allocation9], 8192
    $region49: #{tpu_custom_call.1} parent=1 // pred_fallthru
      _
    // Predicated region
    $region50: #{tpu_custom_call.1} parent=1 // pred_check
      _
    $region51: #{tpu_custom_call.1} parent=1 // pred_check_branch
      %111 = sbr.rel (0) target = $region53
    $region52: #{tpu_custom_call.1} parent=1 // pred_region
      %112 = dma.done [#allocation12], 1024
    $region53: #{tpu_custom_call.1} parent=1 // pred_fallthru
      _
    // Predicated region
    $region54: #{tpu_custom_call.1} parent=1 // pred_check
      _
    $region55: #{tpu_custom_call.1} parent=1 // pred_check_branch
      %114 = sbr.rel (0) target = $region57
    $region56: #{tpu_custom_call.1} parent=1 // pred_region
      %115 = dma.done [#allocation12], 1024
    $region57: #{tpu_custom_call.1} parent=1 // pred_fallthru
      _
    %v117 = vld [vmem:[#allocation13] sm:$0xff]
    %v118 = vld [vmem:[#allocation13 + $0x8] sm:$0xff]
    %v119 = vld [vmem:[#allocation13 + $0x10] sm:$0xff]
    %v120 = vld [vmem:[#allocation13 + $0x18] sm:$0xff]
    %v121 = vld [vmem:[#allocation13 + $0x20] sm:$0xff]
    %v122 = vld [vmem:[#allocation13 + $0x28] sm:$0xff]
    %v123 = vld [vmem:[#allocation13 + $0x30] sm:$0xff]
    %v124 = vld [vmem:[#allocation13 + $0x38] sm:$0xff]
    %v125 = vld [vmem:[#allocation2] sm:$0xff]
    %v126 = vpack.c.bf16 %v125, %v125
    %v127 = vld [vmem:[#allocation5] sm:$0xff]
    %v128 = vlaneseq
    %v129 = vshrl.u32 %v128, 7
    %v130 = vsub.s32 0, %v129
    %v131 = vrot.slane %v117, %v130
    %v132 = vlaneseq
    %v133 = vshrl.u32 %v132, 7
    %v134 = vsub.s32 0, %v133
    %v135 = vrot.slane %v118, %v134
    %v137 = vunpack.c.l.b16 %v127
    %v138 = vunpack.c.h.b16 %v127
    %v139 = vpack.c.b16 %v137, %v137
    %v140 = vpack.c.b16 %v138, %v138
    %vm141 = vcmask 64512
    %v143 = vsel %vm141, %v126, 0
    %vm145 = vcmask 1043456
    %v147 = vsel %vm145, %v139, 0
    %v150 = vsel %vm145, %v140, 0
    %152 = vmatprep.subr.bf16.mxu0 %v150
    %153 = vmatpush1.bf16.msra.mxu0 %v147
    %154 = vmatprep.subr.bf16.mxu0 0
    %155 = vmatpush1.bf16.msra.mxu0 0
    %156 = vmatprep.subr.bf16.mxu0 0
    %157 = vmatpush1.bf16.msra.mxu0 0
    %158 = vmatprep.subr.bf16.mxu0 0
    %159 = vmatpush1.bf16.msra.mxu0 0
    %160 = vmatprep.subr.bf16.mxu0 0
    %161 = vmatpush1.bf16.msra.mxu0 0
    %162 = vmatprep.subr.bf16.mxu0 0
    %163 = vmatpush1.bf16.msra.mxu0 0
    %164 = vmatprep.subr.bf16.mxu0 0
    %165 = vmatpush1.bf16.msra.mxu0 0
    %166 = vmatprep.subr.bf16.mxu0 0
    %167 = vmatpush1.bf16.msra.mxu0 0
    %168 = vmatprep.subr.bf16.mxu0 0
    %169 = vmatpush1.bf16.msra.mxu0 0
    %170 = vmatprep.subr.bf16.mxu0 0
    %171 = vmatpush1.bf16.msra.mxu0 0
    %172 = vmatprep.subr.bf16.mxu0 0
    %173 = vmatpush1.bf16.msra.mxu0 0
    %174 = vmatprep.subr.bf16.mxu0 0
    %175 = vmatpush1.bf16.msra.mxu0 0
    %176 = vmatprep.subr.bf16.mxu0 0
    %177 = vmatpush1.bf16.msra.mxu0 0
    %178 = vmatprep.subr.bf16.mxu0 0
    %179 = vmatpush1.bf16.msra.mxu0 0
    %180 = vmatprep.subr.bf16.mxu0 0
    %181 = vmatpush1.bf16.msra.mxu0 0
    %182 = vmatprep.subr.bf16.mxu0 0
    %183 = vmatpush1.bf16.msra.mxu0 0
    %184 = vmatprep.mubr.bf16.mxu0 0
    %185 = vmatmul.mubr.bf16.gmra.mrb[0].mxu0 %v143
    %v186 = vpop.f32.mrb[0].mxu0
    %v187 = vadd.f32 %v131, %v186
    %v188 = vpop.f32.mrb[0].mxu0
    %v189 = vadd.f32 %v135, %v188
    %v190 = vpop.f32.mrb[0].mxu0
    %v191 = vpop.f32.mrb[0].mxu0
    %192 = vdwg.mxu0
    %v193 = vmax.f32 %v187, 0.0
    %v194 = vmax.f32 %v189, 0.0
    %v195 = vpack.c.bf16 %v193, %v193
    %v196 = vpack.c.bf16 %v194, %v194
    %v197 = vld [vmem:[#allocation7] sm:$0xff]
    %v198 = vld [vmem:[#allocation7 + $0x8] sm:$0xff]
    %v199 = vld [vmem:[#allocation7 + $0x10] sm:$0xff]
    %v200 = vld [vmem:[#allocation7 + $0x18] sm:$0xff]
    %v201 = vld [vmem:[#allocation7 + $0x20] sm:$0xff]
    %v202 = vld [vmem:[#allocation7 + $0x28] sm:$0xff]
    %v203 = vld [vmem:[#allocation7 + $0x30] sm:$0xff]
    %v204 = vld [vmem:[#allocation7 + $0x38] sm:$0xff]
    %v205 = vld [vmem:[#allocation7 + $0x40] sm:$0xff]
    %v206 = vld [vmem:[#allocation7 + $0x48] sm:$0xff]
    %v207 = vld [vmem:[#allocation7 + $0x50] sm:$0xff]
    %v208 = vld [vmem:[#allocation7 + $0x58] sm:$0xff]
    %v209 = vld [vmem:[#allocation7 + $0x60] sm:$0xff]
    %v210 = vld [vmem:[#allocation7 + $0x68] sm:$0xff]
    %v211 = vld [vmem:[#allocation7 + $0x70] sm:$0xff]
    %v212 = vld [vmem:[#allocation7 + $0x78] sm:$0xff]
    %v213 = vld [vmem:[#allocation7 + $0x80] sm:$0xff]
    %v214 = vld [vmem:[#allocation7 + $0x88] sm:$0xff]
    %v215 = vld [vmem:[#allocation7 + $0x90] sm:$0xff]
    %v216 = vld [vmem:[#allocation7 + $0x98] sm:$0xff]
    %v217 = vld [vmem:[#allocation7 + $0xa0] sm:$0xff]
    %v218 = vld [vmem:[#allocation7 + $0xa8] sm:$0xff]
    %v219 = vld [vmem:[#allocation7 + $0xb0] sm:$0xff]
    %v220 = vld [vmem:[#allocation7 + $0xb8] sm:$0xff]
    %v221 = vld [vmem:[#allocation7 + $0xc0] sm:$0xff]
    %v222 = vld [vmem:[#allocation7 + $0xc8] sm:$0xff]
    %v223 = vld [vmem:[#allocation7 + $0xd0] sm:$0xff]
    %v224 = vld [vmem:[#allocation7 + $0xd8] sm:$0xff]
    %v225 = vld [vmem:[#allocation7 + $0xe0] sm:$0xff]
    %v226 = vld [vmem:[#allocation7 + $0xe8] sm:$0xff]
    %v227 = vld [vmem:[#allocation7 + $0xf0] sm:$0xff]
    %v228 = vld [vmem:[#allocation7 + $0xf8] sm:$0xff]
    %v229 = vld [vmem:[#allocation7 + $0x100] sm:$0xff]
    %v230 = vld [vmem:[#allocation7 + $0x108] sm:$0xff]
    %v231 = vld [vmem:[#allocation7 + $0x110] sm:$0xff]
    %v232 = vld [vmem:[#allocation7 + $0x118] sm:$0xff]
    %v233 = vld [vmem:[#allocation7 + $0x120] sm:$0xff]
    %v234 = vld [vmem:[#allocation7 + $0x128] sm:$0xff]
    %v235 = vld [vmem:[#allocation7 + $0x130] sm:$0xff]
    %v236 = vld [vmem:[#allocation7 + $0x138] sm:$0xff]
    %v237 = vld [vmem:[#allocation7 + $0x140] sm:$0xff]
    %v238 = vld [vmem:[#allocation7 + $0x148] sm:$0xff]
    %v239 = vld [vmem:[#allocation7 + $0x150] sm:$0xff]
    %v240 = vld [vmem:[#allocation7 + $0x158] sm:$0xff]
    %v241 = vld [vmem:[#allocation7 + $0x160] sm:$0xff]
    %v242 = vld [vmem:[#allocation7 + $0x168] sm:$0xff]
    %v243 = vld [vmem:[#allocation7 + $0x170] sm:$0xff]
    %v244 = vld [vmem:[#allocation7 + $0x178] sm:$0xff]
    %v245 = vld [vmem:[#allocation7 + $0x180] sm:$0xff]
    %v246 = vld [vmem:[#allocation7 + $0x188] sm:$0xff]
    %v247 = vld [vmem:[#allocation7 + $0x190] sm:$0xff]
    %v248 = vld [vmem:[#allocation7 + $0x198] sm:$0xff]
    %v249 = vld [vmem:[#allocation7 + $0x1a0] sm:$0xff]
    %v250 = vld [vmem:[#allocation7 + $0x1a8] sm:$0xff]
    %v251 = vld [vmem:[#allocation7 + $0x1b0] sm:$0xff]
    %v252 = vld [vmem:[#allocation7 + $0x1b8] sm:$0xff]
    %v253 = vld [vmem:[#allocation7 + $0x1c0] sm:$0xff]
    %v254 = vld [vmem:[#allocation7 + $0x1c8] sm:$0xff]
    %v255 = vld [vmem:[#allocation7 + $0x1d0] sm:$0xff]
    %v256 = vld [vmem:[#allocation7 + $0x1d8] sm:$0xff]
    %v257 = vld [vmem:[#allocation7 + $0x1e0] sm:$0xff]
    %v258 = vld [vmem:[#allocation7 + $0x1e8] sm:$0xff]
    %v259 = vld [vmem:[#allocation7 + $0x1f0] sm:$0xff]
    %v260 = vld [vmem:[#allocation7 + $0x1f8] sm:$0xff]
    %v261 = vlaneseq
    %v262 = vshrl.u32 %v261, 7
    %v263 = vsub.s32 1, %v262
    %v264 = vrot.slane %v117, %v263
    %v265 = vlaneseq
    %v266 = vshrl.u32 %v265, 7
    %v267 = vsub.s32 1, %v266
    %v268 = vrot.slane %v118, %v267
    %v269 = vlaneseq
    %v270 = vshrl.u32 %v269, 7
    %v271 = vsub.s32 1, %v270
    %v272 = vrot.slane %v119, %v271
    %v273 = vlaneseq
    %v274 = vshrl.u32 %v273, 7
    %v275 = vsub.s32 1, %v274
    %v276 = vrot.slane %v120, %v275
    %v341 = vunpack.c.l.b16 %v197
    %v342 = vunpack.c.h.b16 %v197
    %v343 = vunpack.c.l.b16 %v198
    %v344 = vunpack.c.h.b16 %v198
    %v345 = vunpack.c.l.b16 %v199
    %v346 = vunpack.c.h.b16 %v199
    %v347 = vunpack.c.l.b16 %v200
    %v348 = vunpack.c.h.b16 %v200
    %v349 = vunpack.c.l.b16 %v201
    %v350 = vunpack.c.h.b16 %v201
    %v351 = vunpack.c.l.b16 %v202
    %v352 = vunpack.c.h.b16 %v202
    %v353 = vunpack.c.l.b16 %v203
    %v354 = vunpack.c.h.b16 %v203
    %v355 = vunpack.c.l.b16 %v204
    %v356 = vunpack.c.h.b16 %v204
    %v357 = vunpack.c.l.b16 %v205
    %v358 = vunpack.c.h.b16 %v205
    %v359 = vunpack.c.l.b16 %v206
    %v360 = vunpack.c.h.b16 %v206
    %v361 = vunpack.c.l.b16 %v207
    %v362 = vunpack.c.h.b16 %v207
    %v363 = vunpack.c.l.b16 %v208
    %v364 = vunpack.c.h.b16 %v208
    %v365 = vunpack.c.l.b16 %v209
    %v366 = vunpack.c.h.b16 %v209
    %v367 = vunpack.c.l.b16 %v210
    %v368 = vunpack.c.h.b16 %v210
    %v369 = vunpack.c.l.b16 %v211
    %v370 = vunpack.c.h.b16 %v211
    %v371 = vunpack.c.l.b16 %v212
    %v372 = vunpack.c.h.b16 %v212
    %v373 = vunpack.c.l.b16 %v213
    %v374 = vunpack.c.h.b16 %v213
    %v375 = vunpack.c.l.b16 %v214
    %v376 = vunpack.c.h.b16 %v214
    %v377 = vunpack.c.l.b16 %v215
    %v378 = vunpack.c.h.b16 %v215
    %v379 = vunpack.c.l.b16 %v216
    %v380 = vunpack.c.h.b16 %v216
    %v381 = vunpack.c.l.b16 %v217
    %v382 = vunpack.c.h.b16 %v217
    %v383 = vunpack.c.l.b16 %v218
    %v384 = vunpack.c.h.b16 %v218
    %v385 = vunpack.c.l.b16 %v219
    %v386 = vunpack.c.h.b16 %v219
    %v387 = vunpack.c.l.b16 %v220
    %v388 = vunpack.c.h.b16 %v220
    %v389 = vunpack.c.l.b16 %v221
    %v390 = vunpack.c.h.b16 %v221
    %v391 = vunpack.c.l.b16 %v222
    %v392 = vunpack.c.h.b16 %v222
    %v393 = vunpack.c.l.b16 %v223
    %v394 = vunpack.c.h.b16 %v223
    %v395 = vunpack.c.l.b16 %v224
    %v396 = vunpack.c.h.b16 %v224
    %v397 = vunpack.c.l.b16 %v225
    %v398 = vunpack.c.h.b16 %v225
    %v399 = vunpack.c.l.b16 %v226
    %v400 = vunpack.c.h.b16 %v226
    %v401 = vunpack.c.l.b16 %v227
    %v402 = vunpack.c.h.b16 %v227
    %v403 = vunpack.c.l.b16 %v228
    %v404 = vunpack.c.h.b16 %v228
    %v405 = vunpack.c.l.b16 %v229
    %v406 = vunpack.c.h.b16 %v229
    %v407 = vunpack.c.l.b16 %v230
    %v408 = vunpack.c.h.b16 %v230
    %v409 = vunpack.c.l.b16 %v231
    %v410 = vunpack.c.h.b16 %v231
    %v411 = vunpack.c.l.b16 %v232
    %v412 = vunpack.c.h.b16 %v232
    %v413 = vunpack.c.l.b16 %v233
    %v414 = vunpack.c.h.b16 %v233
    %v415 = vunpack.c.l.b16 %v234
    %v416 = vunpack.c.h.b16 %v234
    %v417 = vunpack.c.l.b16 %v235
    %v418 = vunpack.c.h.b16 %v235
    %v419 = vunpack.c.l.b16 %v236
    %v420 = vunpack.c.h.b16 %v236
    %v421 = vunpack.c.l.b16 %v237
    %v422 = vunpack.c.h.b16 %v237
    %v423 = vunpack.c.l.b16 %v238
    %v424 = vunpack.c.h.b16 %v238
    %v425 = vunpack.c.l.b16 %v239
    %v426 = vunpack.c.h.b16 %v239
    %v427 = vunpack.c.l.b16 %v240
    %v428 = vunpack.c.h.b16 %v240
    %v429 = vunpack.c.l.b16 %v241
    %v430 = vunpack.c.h.b16 %v241
    %v431 = vunpack.c.l.b16 %v242
    %v432 = vunpack.c.h.b16 %v242
    %v433 = vunpack.c.l.b16 %v243
    %v434 = vunpack.c.h.b16 %v243
    %v435 = vunpack.c.l.b16 %v244
    %v436 = vunpack.c.h.b16 %v244
    %v437 = vunpack.c.l.b16 %v245
    %v438 = vunpack.c.h.b16 %v245
    %v439 = vunpack.c.l.b16 %v246
    %v440 = vunpack.c.h.b16 %v246
    %v441 = vunpack.c.l.b16 %v247
    %v442 = vunpack.c.h.b16 %v247
    %v443 = vunpack.c.l.b16 %v248
    %v444 = vunpack.c.h.b16 %v248
    %v445 = vunpack.c.l.b16 %v249
    %v446 = vunpack.c.h.b16 %v249
    %v447 = vunpack.c.l.b16 %v250
    %v448 = vunpack.c.h.b16 %v250
    %v449 = vunpack.c.l.b16 %v251
    %v450 = vunpack.c.h.b16 %v251
    %v451 = vunpack.c.l.b16 %v252
    %v452 = vunpack.c.h.b16 %v252
    %v453 = vunpack.c.l.b16 %v253
    %v454 = vunpack.c.h.b16 %v253
    %v455 = vunpack.c.l.b16 %v254
    %v456 = vunpack.c.h.b16 %v254
    %v457 = vunpack.c.l.b16 %v255
    %v458 = vunpack.c.h.b16 %v255
    %v459 = vunpack.c.l.b16 %v256
    %v460 = vunpack.c.h.b16 %v256
    %v461 = vunpack.c.l.b16 %v257
    %v462 = vunpack.c.h.b16 %v257
    %v463 = vunpack.c.l.b16 %v258
    %v464 = vunpack.c.h.b16 %v258
    %v465 = vunpack.c.l.b16 %v259
    %v466 = vunpack.c.h.b16 %v259
    %v467 = vunpack.c.l.b16 %v260
    %v468 = vunpack.c.h.b16 %v260
    %v469 = vpack.c.b16 %v345, %v341
    %v470 = vpack.c.b16 %v346, %v342
    %v471 = vpack.c.b16 %v347, %v343
    %v472 = vpack.c.b16 %v348, %v344
    %v473 = vpack.c.b16 %v353, %v349
    %v474 = vpack.c.b16 %v354, %v350
    %v475 = vpack.c.b16 %v355, %v351
    %v476 = vpack.c.b16 %v356, %v352
    %v477 = vpack.c.b16 %v361, %v357
    %v478 = vpack.c.b16 %v362, %v358
    %v479 = vpack.c.b16 %v363, %v359
    %v480 = vpack.c.b16 %v364, %v360
    %v481 = vpack.c.b16 %v369, %v365
    %v482 = vpack.c.b16 %v370, %v366
    %v483 = vpack.c.b16 %v371, %v367
    %v484 = vpack.c.b16 %v372, %v368
    %v485 = vpack.c.b16 %v377, %v373
    %v486 = vpack.c.b16 %v378, %v374
    %v487 = vpack.c.b16 %v379, %v375
    %v488 = vpack.c.b16 %v380, %v376
    %v489 = vpack.c.b16 %v385, %v381
    %v490 = vpack.c.b16 %v386, %v382
    %v491 = vpack.c.b16 %v387, %v383
    %v492 = vpack.c.b16 %v388, %v384
    %v493 = vpack.c.b16 %v393, %v389
    %v494 = vpack.c.b16 %v394, %v390
    %v495 = vpack.c.b16 %v395, %v391
    %v496 = vpack.c.b16 %v396, %v392
    %v497 = vpack.c.b16 %v401, %v397
    %v498 = vpack.c.b16 %v402, %v398
    %v499 = vpack.c.b16 %v403, %v399
    %v500 = vpack.c.b16 %v404, %v400
    %v501 = vpack.c.b16 %v409, %v405
    %v502 = vpack.c.b16 %v410, %v406
    %v503 = vpack.c.b16 %v411, %v407
    %v504 = vpack.c.b16 %v412, %v408
    %v505 = vpack.c.b16 %v417, %v413
    %v506 = vpack.c.b16 %v418, %v414
    %v507 = vpack.c.b16 %v419, %v415
    %v508 = vpack.c.b16 %v420, %v416
    %v509 = vpack.c.b16 %v425, %v421
    %v510 = vpack.c.b16 %v426, %v422
    %v511 = vpack.c.b16 %v427, %v423
    %v512 = vpack.c.b16 %v428, %v424
    %v513 = vpack.c.b16 %v433, %v429
    %v514 = vpack.c.b16 %v434, %v430
    %v515 = vpack.c.b16 %v435, %v431
    %v516 = vpack.c.b16 %v436, %v432
    %v517 = vpack.c.b16 %v441, %v437
    %v518 = vpack.c.b16 %v442, %v438
    %v519 = vpack.c.b16 %v443, %v439
    %v520 = vpack.c.b16 %v444, %v440
    %v521 = vpack.c.b16 %v449, %v445
    %v522 = vpack.c.b16 %v450, %v446
    %v523 = vpack.c.b16 %v451, %v447
    %v524 = vpack.c.b16 %v452, %v448
    %v525 = vpack.c.b16 %v457, %v453
    %v526 = vpack.c.b16 %v458, %v454
    %v527 = vpack.c.b16 %v459, %v455
    %v528 = vpack.c.b16 %v460, %v456
    %v529 = vpack.c.b16 %v465, %v461
    %v530 = vpack.c.b16 %v466, %v462
    %v531 = vpack.c.b16 %v467, %v463
    %v532 = vpack.c.b16 %v468, %v464
    %597 = vmatprep.subr.bf16.mxu0 %v470
    %598 = vmatpush1.bf16.msra.mxu0 %v469
    %599 = vmatprep.subr.bf16.mxu0 %v474
    %600 = vmatpush1.bf16.msra.mxu0 %v473
    %601 = vmatprep.subr.bf16.mxu0 %v478
    %602 = vmatpush1.bf16.msra.mxu0 %v477
    %603 = vmatprep.subr.bf16.mxu0 %v482
    %604 = vmatpush1.bf16.msra.mxu0 %v481
    %605 = vmatprep.subr.bf16.mxu0 %v486
    %606 = vmatpush1.bf16.msra.mxu0 %v485
    %607 = vmatprep.subr.bf16.mxu0 %v490
    %608 = vmatpush1.bf16.msra.mxu0 %v489
    %609 = vmatprep.subr.bf16.mxu0 %v494
    %610 = vmatpush1.bf16.msra.mxu0 %v493
    %611 = vmatprep.subr.bf16.mxu0 %v498
    %612 = vmatpush1.bf16.msra.mxu0 %v497
    %613 = vmatprep.subr.bf16.mxu0 %v502
    %614 = vmatpush1.bf16.msra.mxu0 %v501
    %615 = vmatprep.subr.bf16.mxu0 %v506
    %616 = vmatpush1.bf16.msra.mxu0 %v505
    %617 = vmatprep.subr.bf16.mxu0 %v510
    %618 = vmatpush1.bf16.msra.mxu0 %v509
    %619 = vmatprep.subr.bf16.mxu0 %v514
    %620 = vmatpush1.bf16.msra.mxu0 %v513
    %621 = vmatprep.subr.bf16.mxu0 %v518
    %622 = vmatpush1.bf16.msra.mxu0 %v517
    %623 = vmatprep.subr.bf16.mxu0 %v522
    %624 = vmatpush1.bf16.msra.mxu0 %v521
    %625 = vmatprep.subr.bf16.mxu0 %v526
    %626 = vmatpush1.bf16.msra.mxu0 %v525
    %627 = vmatprep.subr.bf16.mxu0 %v530
    %628 = vmatpush1.bf16.msra.mxu0 %v529
    %629 = vmatprep.mubr.bf16.mxu0 %v196
    %630 = vmatmul.mubr.bf16.gmra.mrb[0].mxu0 %v195
    %v631 = vpop.f32.mrb[0].mxu0
    %v632 = vadd.f32 %v264, %v631
    %v633 = vpop.f32.mrb[0].mxu0
    %v634 = vadd.f32 %v268, %v633
    %v635 = vpop.f32.mrb[0].mxu0
    %v636 = vpop.f32.mrb[0].mxu0
    %637 = vdwg.mxu0
    %638 = vmatprep.subr.bf16.mxu0 %v472
    %639 = vmatpush1.bf16.msra.mxu0 %v471
    %640 = vmatprep.subr.bf16.mxu0 %v476
    %641 = vmatpush1.bf16.msra.mxu0 %v475
    %642 = vmatprep.subr.bf16.mxu0 %v480
    %643 = vmatpush1.bf16.msra.mxu0 %v479
    %644 = vmatprep.subr.bf16.mxu0 %v484
    %645 = vmatpush1.bf16.msra.mxu0 %v483
    %646 = vmatprep.subr.bf16.mxu0 %v488
    %647 = vmatpush1.bf16.msra.mxu0 %v487
    %648 = vmatprep.subr.bf16.mxu0 %v492
    %649 = vmatpush1.bf16.msra.mxu0 %v491
    %650 = vmatprep.subr.bf16.mxu0 %v496
    %651 = vmatpush1.bf16.msra.mxu0 %v495
    %652 = vmatprep.subr.bf16.mxu0 %v500
    %653 = vmatpush1.bf16.msra.mxu0 %v499
    %654 = vmatprep.subr.bf16.mxu0 %v504
    %655 = vmatpush1.bf16.msra.mxu0 %v503
    %656 = vmatprep.subr.bf16.mxu0 %v508
    %657 = vmatpush1.bf16.msra.mxu0 %v507
    %658 = vmatprep.subr.bf16.mxu0 %v512
    %659 = vmatpush1.bf16.msra.mxu0 %v511
    %660 = vmatprep.subr.bf16.mxu0 %v516
    %661 = vmatpush1.bf16.msra.mxu0 %v515
    %662 = vmatprep.subr.bf16.mxu0 %v520
    %663 = vmatpush1.bf16.msra.mxu0 %v519
    %664 = vmatprep.subr.bf16.mxu0 %v524
    %665 = vmatpush1.bf16.msra.mxu0 %v523
    %666 = vmatprep.subr.bf16.mxu0 %v528
    %667 = vmatpush1.bf16.msra.mxu0 %v527
    %668 = vmatprep.subr.bf16.mxu0 %v532
    %669 = vmatpush1.bf16.msra.mxu0 %v531
    %670 = vmatprep.mubr.bf16.mxu0 %v196
    %671 = vmatmul.mubr.bf16.gmra.mrb[0].mxu0 %v195
    %v672 = vpop.f32.mrb[0].mxu0
    %v673 = vadd.f32 %v272, %v672
    %v674 = vpop.f32.mrb[0].mxu0
    %v675 = vadd.f32 %v276, %v674
    %v676 = vpop.f32.mrb[0].mxu0
    %v677 = vpop.f32.mrb[0].mxu0
    %678 = vdwg.mxu0
    %v679 = vmax.f32 %v632, 0.0
    %v680 = vmax.f32 %v634, 0.0
    %v681 = vmax.f32 %v673, 0.0
    %v682 = vmax.f32 %v675, 0.0
    %v683 = vpack.c.bf16 %v679, %v679
    %v684 = vpack.c.bf16 %v680, %v680
    %v685 = vpack.c.bf16 %v681, %v681
    %v686 = vpack.c.bf16 %v682, %v682
    %v687 = vld [vmem:[#allocation8] sm:$0xff]
    %v688 = vld [vmem:[#allocation8 + $0x8] sm:$0xff]
    %v689 = vld [vmem:[#allocation8 + $0x10] sm:$0xff]
    %v690 = vld [vmem:[#allocation8 + $0x18] sm:$0xff]
    %v691 = vld [vmem:[#allocation8 + $0x20] sm:$0xff]
    %v692 = vld [vmem:[#allocation8 + $0x28] sm:$0xff]
    %v693 = vld [vmem:[#allocation8 + $0x30] sm:$0xff]
    %v694 = vld [vmem:[#allocation8 + $0x38] sm:$0xff]
    %v695 = vld [vmem:[#allocation8 + $0x40] sm:$0xff]
    %v696 = vld [vmem:[#allocation8 + $0x48] sm:$0xff]
    %v697 = vld [vmem:[#allocation8 + $0x50] sm:$0xff]
    %v698 = vld [vmem:[#allocation8 + $0x58] sm:$0xff]
    %v699 = vld [vmem:[#allocation8 + $0x60] sm:$0xff]
    %v700 = vld [vmem:[#allocation8 + $0x68] sm:$0xff]
    %v701 = vld [vmem:[#allocation8 + $0x70] sm:$0xff]
    %v702 = vld [vmem:[#allocation8 + $0x78] sm:$0xff]
    %v703 = vld [vmem:[#allocation8 + $0x80] sm:$0xff]
    %v704 = vld [vmem:[#allocation8 + $0x88] sm:$0xff]
    %v705 = vld [vmem:[#allocation8 + $0x90] sm:$0xff]
    %v706 = vld [vmem:[#allocation8 + $0x98] sm:$0xff]
    %v707 = vld [vmem:[#allocation8 + $0xa0] sm:$0xff]
    %v708 = vld [vmem:[#allocation8 + $0xa8] sm:$0xff]
    %v709 = vld [vmem:[#allocation8 + $0xb0] sm:$0xff]
    %v710 = vld [vmem:[#allocation8 + $0xb8] sm:$0xff]
    %v711 = vld [vmem:[#allocation8 + $0xc0] sm:$0xff]
    %v712 = vld [vmem:[#allocation8 + $0xc8] sm:$0xff]
    %v713 = vld [vmem:[#allocation8 + $0xd0] sm:$0xff]
    %v714 = vld [vmem:[#allocation8 + $0xd8] sm:$0xff]
    %v715 = vld [vmem:[#allocation8 + $0xe0] sm:$0xff]
    %v716 = vld [vmem:[#allocation8 + $0xe8] sm:$0xff]
    %v717 = vld [vmem:[#allocation8 + $0xf0] sm:$0xff]
    %v718 = vld [vmem:[#allocation8 + $0xf8] sm:$0xff]
    %v719 = vld [vmem:[#allocation8 + $0x100] sm:$0xff]
    %v720 = vld [vmem:[#allocation8 + $0x108] sm:$0xff]
    %v721 = vld [vmem:[#allocation8 + $0x110] sm:$0xff]
    %v722 = vld [vmem:[#allocation8 + $0x118] sm:$0xff]
    %v723 = vld [vmem:[#allocation8 + $0x120] sm:$0xff]
    %v724 = vld [vmem:[#allocation8 + $0x128] sm:$0xff]
    %v725 = vld [vmem:[#allocation8 + $0x130] sm:$0xff]
    %v726 = vld [vmem:[#allocation8 + $0x138] sm:$0xff]
    %v727 = vld [vmem:[#allocation8 + $0x140] sm:$0xff]
    %v728 = vld [vmem:[#allocation8 + $0x148] sm:$0xff]
    %v729 = vld [vmem:[#allocation8 + $0x150] sm:$0xff]
    %v730 = vld [vmem:[#allocation8 + $0x158] sm:$0xff]
    %v731 = vld [vmem:[#allocation8 + $0x160] sm:$0xff]
    %v732 = vld [vmem:[#allocation8 + $0x168] sm:$0xff]
    %v733 = vld [vmem:[#allocation8 + $0x170] sm:$0xff]
    %v734 = vld [vmem:[#allocation8 + $0x178] sm:$0xff]
    %v735 = vld [vmem:[#allocation8 + $0x180] sm:$0xff]
    %v736 = vld [vmem:[#allocation8 + $0x188] sm:$0xff]
    %v737 = vld [vmem:[#allocation8 + $0x190] sm:$0xff]
    %v738 = vld [vmem:[#allocation8 + $0x198] sm:$0xff]
    %v739 = vld [vmem:[#allocation8 + $0x1a0] sm:$0xff]
    %v740 = vld [vmem:[#allocation8 + $0x1a8] sm:$0xff]
    %v741 = vld [vmem:[#allocation8 + $0x1b0] sm:$0xff]
    %v742 = vld [vmem:[#allocation8 + $0x1b8] sm:$0xff]
    %v743 = vld [vmem:[#allocation8 + $0x1c0] sm:$0xff]
    %v744 = vld [vmem:[#allocation8 + $0x1c8] sm:$0xff]
    %v745 = vld [vmem:[#allocation8 + $0x1d0] sm:$0xff]
    %v746 = vld [vmem:[#allocation8 + $0x1d8] sm:$0xff]
    %v747 = vld [vmem:[#allocation8 + $0x1e0] sm:$0xff]
    %v748 = vld [vmem:[#allocation8 + $0x1e8] sm:$0xff]
    %v749 = vld [vmem:[#allocation8 + $0x1f0] sm:$0xff]
    %v750 = vld [vmem:[#allocation8 + $0x1f8] sm:$0xff]
    %v751 = vld [vmem:[#allocation8 + $0x200] sm:$0xff]
    %v752 = vld [vmem:[#allocation8 + $0x208] sm:$0xff]
    %v753 = vld [vmem:[#allocation8 + $0x210] sm:$0xff]
    %v754 = vld [vmem:[#allocation8 + $0x218] sm:$0xff]
    %v755 = vld [vmem:[#allocation8 + $0x220] sm:$0xff]
    %v756 = vld [vmem:[#allocation8 + $0x228] sm:$0xff]
    %v757 = vld [vmem:[#allocation8 + $0x230] sm:$0xff]
    %v758 = vld [vmem:[#allocation8 + $0x238] sm:$0xff]
    %v759 = vld [vmem:[#allocation8 + $0x240] sm:$0xff]
    %v760 = vld [vmem:[#allocation8 + $0x248] sm:$0xff]
    %v761 = vld [vmem:[#allocation8 + $0x250] sm:$0xff]
    %v762 = vld [vmem:[#allocation8 + $0x258] sm:$0xff]
    %v763 = vld [vmem:[#allocation8 + $0x260] sm:$0xff]
    %v764 = vld [vmem:[#allocation8 + $0x268] sm:$0xff]
    %v765 = vld [vmem:[#allocation8 + $0x270] sm:$0xff]
    %v766 = vld [vmem:[#allocation8 + $0x278] sm:$0xff]
    %v767 = vld [vmem:[#allocation8 + $0x280] sm:$0xff]
    %v768 = vld [vmem:[#allocation8 + $0x288] sm:$0xff]
    %v769 = vld [vmem:[#allocation8 + $0x290] sm:$0xff]
    %v770 = vld [vmem:[#allocation8 + $0x298] sm:$0xff]
    %v771 = vld [vmem:[#allocation8 + $0x2a0] sm:$0xff]
    %v772 = vld [vmem:[#allocation8 + $0x2a8] sm:$0xff]
    %v773 = vld [vmem:[#allocation8 + $0x2b0] sm:$0xff]
    %v774 = vld [vmem:[#allocation8 + $0x2b8] sm:$0xff]
    %v775 = vld [vmem:[#allocation8 + $0x2c0] sm:$0xff]
    %v776 = vld [vmem:[#allocation8 + $0x2c8] sm:$0xff]
    %v777 = vld [vmem:[#allocation8 + $0x2d0] sm:$0xff]
    %v778 = vld [vmem:[#allocation8 + $0x2d8] sm:$0xff]
    %v779 = vld [vmem:[#allocation8 + $0x2e0] sm:$0xff]
    %v780 = vld [vmem:[#allocation8 + $0x2e8] sm:$0xff]
    %v781 = vld [vmem:[#allocation8 + $0x2f0] sm:$0xff]
    %v782 = vld [vmem:[#allocation8 + $0x2f8] sm:$0xff]
    %v783 = vld [vmem:[#allocation8 + $0x300] sm:$0xff]
    %v784 = vld [vmem:[#allocation8 + $0x308] sm:$0xff]
    %v785 = vld [vmem:[#allocation8 + $0x310] sm:$0xff]
    %v786 = vld [vmem:[#allocation8 + $0x318] sm:$0xff]
    %v787 = vld [vmem:[#allocation8 + $0x320] sm:$0xff]
    %v788 = vld [vmem:[#allocation8 + $0x328] sm:$0xff]
    %v789 = vld [vmem:[#allocation8 + $0x330] sm:$0xff]
    %v790 = vld [vmem:[#allocation8 + $0x338] sm:$0xff]
    %v791 = vld [vmem:[#allocation8 + $0x340] sm:$0xff]
    %v792 = vld [vmem:[#allocation8 + $0x348] sm:$0xff]
    %v793 = vld [vmem:[#allocation8 + $0x350] sm:$0xff]
    %v794 = vld [vmem:[#allocation8 + $0x358] sm:$0xff]
    %v795 = vld [vmem:[#allocation8 + $0x360] sm:$0xff]
    %v796 = vld [vmem:[#allocation8 + $0x368] sm:$0xff]
    %v797 = vld [vmem:[#allocation8 + $0x370] sm:$0xff]
    %v798 = vld [vmem:[#allocation8 + $0x378] sm:$0xff]
    %v799 = vld [vmem:[#allocation8 + $0x380] sm:$0xff]
    %v800 = vld [vmem:[#allocation8 + $0x388] sm:$0xff]
    %v801 = vld [vmem:[#allocation8 + $0x390] sm:$0xff]
    %v802 = vld [vmem:[#allocation8 + $0x398] sm:$0xff]
    %v803 = vld [vmem:[#allocation8 + $0x3a0] sm:$0xff]
    %v804 = vld [vmem:[#allocation8 + $0x3a8] sm:$0xff]
    %v805 = vld [vmem:[#allocation8 + $0x3b0] sm:$0xff]
    %v806 = vld [vmem:[#allocation8 + $0x3b8] sm:$0xff]
    %v807 = vld [vmem:[#allocation8 + $0x3c0] sm:$0xff]
    %v808 = vld [vmem:[#allocation8 + $0x3c8] sm:$0xff]
    %v809 = vld [vmem:[#allocation8 + $0x3d0] sm:$0xff]
    %v810 = vld [vmem:[#allocation8 + $0x3d8] sm:$0xff]
    %v811 = vld [vmem:[#allocation8 + $0x3e0] sm:$0xff]
    %v812 = vld [vmem:[#allocation8 + $0x3e8] sm:$0xff]
    %v813 = vld [vmem:[#allocation8 + $0x3f0] sm:$0xff]
    %v814 = vld [vmem:[#allocation8 + $0x3f8] sm:$0xff]
    %v815 = vld [vmem:[#allocation8 + $0x400] sm:$0xff]
    %v816 = vld [vmem:[#allocation8 + $0x408] sm:$0xff]
    %v817 = vld [vmem:[#allocation8 + $0x410] sm:$0xff]
    %v818 = vld [vmem:[#allocation8 + $0x418] sm:$0xff]
    %v819 = vld [vmem:[#allocation8 + $0x420] sm:$0xff]
    %v820 = vld [vmem:[#allocation8 + $0x428] sm:$0xff]
    %v821 = vld [vmem:[#allocation8 + $0x430] sm:$0xff]
    %v822 = vld [vmem:[#allocation8 + $0x438] sm:$0xff]
    %v823 = vld [vmem:[#allocation8 + $0x440] sm:$0xff]
    %v824 = vld [vmem:[#allocation8 + $0x448] sm:$0xff]
    %v825 = vld [vmem:[#allocation8 + $0x450] sm:$0xff]
    %v826 = vld [vmem:[#allocation8 + $0x458] sm:$0xff]
    %v827 = vld [vmem:[#allocation8 + $0x460] sm:$0xff]
    %v828 = vld [vmem:[#allocation8 + $0x468] sm:$0xff]
    %v829 = vld [vmem:[#allocation8 + $0x470] sm:$0xff]
    %v830 = vld [vmem:[#allocation8 + $0x478] sm:$0xff]
    %v831 = vld [vmem:[#allocation8 + $0x480] sm:$0xff]
    %v832 = vld [vmem:[#allocation8 + $0x488] sm:$0xff]
    %v833 = vld [vmem:[#allocation8 + $0x490] sm:$0xff]
    %v834 = vld [vmem:[#allocation8 + $0x498] sm:$0xff]
    %v835 = vld [vmem:[#allocation8 + $0x4a0] sm:$0xff]
    %v836 = vld [vmem:[#allocation8 + $0x4a8] sm:$0xff]
    %v837 = vld [vmem:[#allocation8 + $0x4b0] sm:$0xff]
    %v838 = vld [vmem:[#allocation8 + $0x4b8] sm:$0xff]
    %v839 = vld [vmem:[#allocation8 + $0x4c0] sm:$0xff]
    %v840 = vld [vmem:[#allocation8 + $0x4c8] sm:$0xff]
    %v841 = vld [vmem:[#allocation8 + $0x4d0] sm:$0xff]
    %v842 = vld [vmem:[#allocation8 + $0x4d8] sm:$0xff]
    %v843 = vld [vmem:[#allocation8 + $0x4e0] sm:$0xff]
    %v844 = vld [vmem:[#allocation8 + $0x4e8] sm:$0xff]
    %v845 = vld [vmem:[#allocation8 + $0x4f0] sm:$0xff]
    %v846 = vld [vmem:[#allocation8 + $0x4f8] sm:$0xff]
    %v847 = vld [vmem:[#allocation8 + $0x500] sm:$0xff]
    %v848 = vld [vmem:[#allocation8 + $0x508] sm:$0xff]
    %v849 = vld [vmem:[#allocation8 + $0x510] sm:$0xff]
    %v850 = vld [vmem:[#allocation8 + $0x518] sm:$0xff]
    %v851 = vld [vmem:[#allocation8 + $0x520] sm:$0xff]
    %v852 = vld [vmem:[#allocation8 + $0x528] sm:$0xff]
    %v853 = vld [vmem:[#allocation8 + $0x530] sm:$0xff]
    %v854 = vld [vmem:[#allocation8 + $0x538] sm:$0xff]
    %v855 = vld [vmem:[#allocation8 + $0x540] sm:$0xff]
    %v856 = vld [vmem:[#allocation8 + $0x548] sm:$0xff]
    %v857 = vld [vmem:[#allocation8 + $0x550] sm:$0xff]
    %v858 = vld [vmem:[#allocation8 + $0x558] sm:$0xff]
    %v859 = vld [vmem:[#allocation8 + $0x560] sm:$0xff]
    %v860 = vld [vmem:[#allocation8 + $0x568] sm:$0xff]
    %v861 = vld [vmem:[#allocation8 + $0x570] sm:$0xff]
    %v862 = vld [vmem:[#allocation8 + $0x578] sm:$0xff]
    %v863 = vld [vmem:[#allocation8 + $0x580] sm:$0xff]
    %v864 = vld [vmem:[#allocation8 + $0x588] sm:$0xff]
    %v865 = vld [vmem:[#allocation8 + $0x590] sm:$0xff]
    %v866 = vld [vmem:[#allocation8 + $0x598] sm:$0xff]
    %v867 = vld [vmem:[#allocation8 + $0x5a0] sm:$0xff]
    %v868 = vld [vmem:[#allocation8 + $0x5a8] sm:$0xff]
    %v869 = vld [vmem:[#allocation8 + $0x5b0] sm:$0xff]
    %v870 = vld [vmem:[#allocation8 + $0x5b8] sm:$0xff]
    %v871 = vld [vmem:[#allocation8 + $0x5c0] sm:$0xff]
    %v872 = vld [vmem:[#allocation8 + $0x5c8] sm:$0xff]
    %v873 = vld [vmem:[#allocation8 + $0x5d0] sm:$0xff]
    %v874 = vld [vmem:[#allocation8 + $0x5d8] sm:$0xff]
    %v875 = vld [vmem:[#allocation8 + $0x5e0] sm:$0xff]
    %v876 = vld [vmem:[#allocation8 + $0x5e8] sm:$0xff]
    %v877 = vld [vmem:[#allocation8 + $0x5f0] sm:$0xff]
    %v878 = vld [vmem:[#allocation8 + $0x5f8] sm:$0xff]
    %v879 = vld [vmem:[#allocation8 + $0x600] sm:$0xff]
    %v880 = vld [vmem:[#allocation8 + $0x608] sm:$0xff]
    %v881 = vld [vmem:[#allocation8 + $0x610] sm:$0xff]
    %v882 = vld [vmem:[#allocation8 + $0x618] sm:$0xff]
    %v883 = vld [vmem:[#allocation8 + $0x620] sm:$0xff]
    %v884 = vld [vmem:[#allocation8 + $0x628] sm:$0xff]
    %v885 = vld [vmem:[#allocation8 + $0x630] sm:$0xff]
    %v886 = vld [vmem:[#allocation8 + $0x638] sm:$0xff]
    %v887 = vld [vmem:[#allocation8 + $0x640] sm:$0xff]
    %v888 = vld [vmem:[#allocation8 + $0x648] sm:$0xff]
    %v889 = vld [vmem:[#allocation8 + $0x650] sm:$0xff]
    %v890 = vld [vmem:[#allocation8 + $0x658] sm:$0xff]
    %v891 = vld [vmem:[#allocation8 + $0x660] sm:$0xff]
    %v892 = vld [vmem:[#allocation8 + $0x668] sm:$0xff]
    %v893 = vld [vmem:[#allocation8 + $0x670] sm:$0xff]
    %v894 = vld [vmem:[#allocation8 + $0x678] sm:$0xff]
    %v895 = vld [vmem:[#allocation8 + $0x680] sm:$0xff]
    %v896 = vld [vmem:[#allocation8 + $0x688] sm:$0xff]
    %v897 = vld [vmem:[#allocation8 + $0x690] sm:$0xff]
    %v898 = vld [vmem:[#allocation8 + $0x698] sm:$0xff]
    %v899 = vld [vmem:[#allocation8 + $0x6a0] sm:$0xff]
    %v900 = vld [vmem:[#allocation8 + $0x6a8] sm:$0xff]
    %v901 = vld [vmem:[#allocation8 + $0x6b0] sm:$0xff]
    %v902 = vld [vmem:[#allocation8 + $0x6b8] sm:$0xff]
    %v903 = vld [vmem:[#allocation8 + $0x6c0] sm:$0xff]
    %v904 = vld [vmem:[#allocation8 + $0x6c8] sm:$0xff]
    %v905 = vld [vmem:[#allocation8 + $0x6d0] sm:$0xff]
    %v906 = vld [vmem:[#allocation8 + $0x6d8] sm:$0xff]
    %v907 = vld [vmem:[#allocation8 + $0x6e0] sm:$0xff]
    %v908 = vld [vmem:[#allocation8 + $0x6e8] sm:$0xff]
    %v909 = vld [vmem:[#allocation8 + $0x6f0] sm:$0xff]
    %v910 = vld [vmem:[#allocation8 + $0x6f8] sm:$0xff]
    %v911 = vld [vmem:[#allocation8 + $0x700] sm:$0xff]
    %v912 = vld [vmem:[#allocation8 + $0x708] sm:$0xff]
    %v913 = vld [vmem:[#allocation8 + $0x710] sm:$0xff]
    %v914 = vld [vmem:[#allocation8 + $0x718] sm:$0xff]
    %v915 = vld [vmem:[#allocation8 + $0x720] sm:$0xff]
    %v916 = vld [vmem:[#allocation8 + $0x728] sm:$0xff]
    %v917 = vld [vmem:[#allocation8 + $0x730] sm:$0xff]
    %v918 = vld [vmem:[#allocation8 + $0x738] sm:$0xff]
    %v919 = vld [vmem:[#allocation8 + $0x740] sm:$0xff]
    %v920 = vld [vmem:[#allocation8 + $0x748] sm:$0xff]
    %v921 = vld [vmem:[#allocation8 + $0x750] sm:$0xff]
    %v922 = vld [vmem:[#allocation8 + $0x758] sm:$0xff]
    %v923 = vld [vmem:[#allocation8 + $0x760] sm:$0xff]
    %v924 = vld [vmem:[#allocation8 + $0x768] sm:$0xff]
    %v925 = vld [vmem:[#allocation8 + $0x770] sm:$0xff]
    %v926 = vld [vmem:[#allocation8 + $0x778] sm:$0xff]
    %v927 = vld [vmem:[#allocation8 + $0x780] sm:$0xff]
    %v928 = vld [vmem:[#allocation8 + $0x788] sm:$0xff]
    %v929 = vld [vmem:[#allocation8 + $0x790] sm:$0xff]
    %v930 = vld [vmem:[#allocation8 + $0x798] sm:$0xff]
    %v931 = vld [vmem:[#allocation8 + $0x7a0] sm:$0xff]
    %v932 = vld [vmem:[#allocation8 + $0x7a8] sm:$0xff]
    %v933 = vld [vmem:[#allocation8 + $0x7b0] sm:$0xff]
    %v934 = vld [vmem:[#allocation8 + $0x7b8] sm:$0xff]
    %v935 = vld [vmem:[#allocation8 + $0x7c0] sm:$0xff]
    %v936 = vld [vmem:[#allocation8 + $0x7c8] sm:$0xff]
    %v937 = vld [vmem:[#allocation8 + $0x7d0] sm:$0xff]
    %v938 = vld [vmem:[#allocation8 + $0x7d8] sm:$0xff]
    %v939 = vld [vmem:[#allocation8 + $0x7e0] sm:$0xff]
    %v940 = vld [vmem:[#allocation8 + $0x7e8] sm:$0xff]
    %v941 = vld [vmem:[#allocation8 + $0x7f0] sm:$0xff]
    %v942 = vld [vmem:[#allocation8 + $0x7f8] sm:$0xff]
    %v943 = vlaneseq
    %v944 = vshrl.u32 %v943, 7
    %v945 = vsub.s32 2, %v944
    %v946 = vrot.slane %v117, %v945
    %v947 = vlaneseq
    %v948 = vshrl.u32 %v947, 7
    %v949 = vsub.s32 2, %v948
    %v950 = vrot.slane %v118, %v949
    %v951 = vlaneseq
    %v952 = vshrl.u32 %v951, 7
    %v953 = vsub.s32 2, %v952
    %v954 = vrot.slane %v119, %v953
    %v955 = vlaneseq
    %v956 = vshrl.u32 %v955, 7
    %v957 = vsub.s32 2, %v956
    %v958 = vrot.slane %v120, %v957
    %v959 = vlaneseq
    %v960 = vshrl.u32 %v959, 7
    %v961 = vsub.s32 2, %v960
    %v962 = vrot.slane %v121, %v961
    %v963 = vlaneseq
    %v964 = vshrl.u32 %v963, 7
    %v965 = vsub.s32 2, %v964
    %v966 = vrot.slane %v122, %v965
    %v967 = vlaneseq
    %v968 = vshrl.u32 %v967, 7
    %v969 = vsub.s32 2, %v968
    %v970 = vrot.slane %v123, %v969
    %v971 = vlaneseq
    %v972 = vshrl.u32 %v971, 7
    %v973 = vsub.s32 2, %v972
    %v974 = vrot.slane %v124, %v973
    %v1231 = vunpack.c.l.b16 %v687
    %v1232 = vunpack.c.h.b16 %v687
    %v1233 = vunpack.c.l.b16 %v688
    %v1234 = vunpack.c.h.b16 %v688
    %v1235 = vunpack.c.l.b16 %v689
    %v1236 = vunpack.c.h.b16 %v689
    %v1237 = vunpack.c.l.b16 %v690
    %v1238 = vunpack.c.h.b16 %v690
    %v1239 = vunpack.c.l.b16 %v691
    %v1240 = vunpack.c.h.b16 %v691
    %v1241 = vunpack.c.l.b16 %v692
    %v1242 = vunpack.c.h.b16 %v692
    %v1243 = vunpack.c.l.b16 %v693
    %v1244 = vunpack.c.h.b16 %v693
    %v1245 = vunpack.c.l.b16 %v694
    %v1246 = vunpack.c.h.b16 %v694
    %v1247 = vunpack.c.l.b16 %v695
    %v1248 = vunpack.c.h.b16 %v695
    %v1249 = vunpack.c.l.b16 %v696
    %v1250 = vunpack.c.h.b16 %v696
    %v1251 = vunpack.c.l.b16 %v697
    %v1252 = vunpack.c.h.b16 %v697
    %v1253 = vunpack.c.l.b16 %v698
    %v1254 = vunpack.c.h.b16 %v698
    %v1255 = vunpack.c.l.b16 %v699
    %v1256 = vunpack.c.h.b16 %v699
    %v1257 = vunpack.c.l.b16 %v700
    %v1258 = vunpack.c.h.b16 %v700
    %v1259 = vunpack.c.l.b16 %v701
    %v1260 = vunpack.c.h.b16 %v701
    %v1261 = vunpack.c.l.b16 %v702
    %v1262 = vunpack.c.h.b16 %v702
    %v1263 = vunpack.c.l.b16 %v703
    %v1264 = vunpack.c.h.b16 %v703
    %v1265 = vunpack.c.l.b16 %v704
    %v1266 = vunpack.c.h.b16 %v704
    %v1267 = vunpack.c.l.b16 %v705
    %v1268 = vunpack.c.h.b16 %v705
    %v1269 = vunpack.c.l.b16 %v706
    %v1270 = vunpack.c.h.b16 %v706
    %v1271 = vunpack.c.l.b16 %v707
    %v1272 = vunpack.c.h.b16 %v707
    %v1273 = vunpack.c.l.b16 %v708
    %v1274 = vunpack.c.h.b16 %v708
    %v1275 = vunpack.c.l.b16 %v709
    %v1276 = vunpack.c.h.b16 %v709
    %v1277 = vunpack.c.l.b16 %v710
    %v1278 = vunpack.c.h.b16 %v710
    %v1279 = vunpack.c.l.b16 %v711
    %v1280 = vunpack.c.h.b16 %v711
    %v1281 = vunpack.c.l.b16 %v712
    %v1282 = vunpack.c.h.b16 %v712
    %v1283 = vunpack.c.l.b16 %v713
    %v1284 = vunpack.c.h.b16 %v713
    %v1285 = vunpack.c.l.b16 %v714
    %v1286 = vunpack.c.h.b16 %v714
    %v1287 = vunpack.c.l.b16 %v715
    %v1288 = vunpack.c.h.b16 %v715
    %v1289 = vunpack.c.l.b16 %v716
    %v1290 = vunpack.c.h.b16 %v716
    %v1291 = vunpack.c.l.b16 %v717
    %v1292 = vunpack.c.h.b16 %v717
    %v1293 = vunpack.c.l.b16 %v718
    %v1294 = vunpack.c.h.b16 %v718
    %v1295 = vunpack.c.l.b16 %v719
    %v1296 = vunpack.c.h.b16 %v719
    %v1297 = vunpack.c.l.b16 %v720
    %v1298 = vunpack.c.h.b16 %v720
    %v1299 = vunpack.c.l.b16 %v721
    %v1300 = vunpack.c.h.b16 %v721
    %v1301 = vunpack.c.l.b16 %v722
    %v1302 = vunpack.c.h.b16 %v722
    %v1303 = vunpack.c.l.b16 %v723
    %v1304 = vunpack.c.h.b16 %v723
    %v1305 = vunpack.c.l.b16 %v724
    %v1306 = vunpack.c.h.b16 %v724
    %v1307 = vunpack.c.l.b16 %v725
    %v1308 = vunpack.c.h.b16 %v725
    %v1309 = vunpack.c.l.b16 %v726
    %v1310 = vunpack.c.h.b16 %v726
    %v1311 = vunpack.c.l.b16 %v727
    %v1312 = vunpack.c.h.b16 %v727
    %v1313 = vunpack.c.l.b16 %v728
    %v1314 = vunpack.c.h.b16 %v728
    %v1315 = vunpack.c.l.b16 %v729
    %v1316 = vunpack.c.h.b16 %v729
    %v1317 = vunpack.c.l.b16 %v730
    %v1318 = vunpack.c.h.b16 %v730
    %v1319 = vunpack.c.l.b16 %v731
    %v1320 = vunpack.c.h.b16 %v731
    %v1321 = vunpack.c.l.b16 %v732
    %v1322 = vunpack.c.h.b16 %v732
    %v1323 = vunpack.c.l.b16 %v733
    %v1324 = vunpack.c.h.b16 %v733
    %v1325 = vunpack.c.l.b16 %v734
    %v1326 = vunpack.c.h.b16 %v734
    %v1327 = vunpack.c.l.b16 %v735
    %v1328 = vunpack.c.h.b16 %v735
    %v1329 = vunpack.c.l.b16 %v736
    %v1330 = vunpack.c.h.b16 %v736
    %v1331 = vunpack.c.l.b16 %v737
    %v1332 = vunpack.c.h.b16 %v737
    %v1333 = vunpack.c.l.b16 %v738
    %v1334 = vunpack.c.h.b16 %v738
    %v1335 = vunpack.c.l.b16 %v739
    %v1336 = vunpack.c.h.b16 %v739
    %v1337 = vunpack.c.l.b16 %v740
    %v1338 = vunpack.c.h.b16 %v740
    %v1339 = vunpack.c.l.b16 %v741
    %v1340 = vunpack.c.h.b16 %v741
    %v1341 = vunpack.c.l.b16 %v742
    %v1342 = vunpack.c.h.b16 %v742
    %v1343 = vunpack.c.l.b16 %v743
    %v1344 = vunpack.c.h.b16 %v743
    %v1345 = vunpack.c.l.b16 %v744
    %v1346 = vunpack.c.h.b16 %v744
    %v1347 = vunpack.c.l.b16 %v745
    %v1348 = vunpack.c.h.b16 %v745
    %v1349 = vunpack.c.l.b16 %v746
    %v1350 = vunpack.c.h.b16 %v746
    %v1351 = vunpack.c.l.b16 %v747
    %v1352 = vunpack.c.h.b16 %v747
    %v1353 = vunpack.c.l.b16 %v748
    %v1354 = vunpack.c.h.b16 %v748
    %v1355 = vunpack.c.l.b16 %v749
    %v1356 = vunpack.c.h.b16 %v749
    %v1357 = vunpack.c.l.b16 %v750
    %v1358 = vunpack.c.h.b16 %v750
    %v1359 = vunpack.c.l.b16 %v751
    %v1360 = vunpack.c.h.b16 %v751
    %v1361 = vunpack.c.l.b16 %v752
    %v1362 = vunpack.c.h.b16 %v752
    %v1363 = vunpack.c.l.b16 %v753
    %v1364 = vunpack.c.h.b16 %v753
    %v1365 = vunpack.c.l.b16 %v754
    %v1366 = vunpack.c.h.b16 %v754
    %v1367 = vunpack.c.l.b16 %v755
    %v1368 = vunpack.c.h.b16 %v755
    %v1369 = vunpack.c.l.b16 %v756
    %v1370 = vunpack.c.h.b16 %v756
    %v1371 = vunpack.c.l.b16 %v757
    %v1372 = vunpack.c.h.b16 %v757
    %v1373 = vunpack.c.l.b16 %v758
    %v1374 = vunpack.c.h.b16 %v758
    %v1375 = vunpack.c.l.b16 %v759
    %v1376 = vunpack.c.h.b16 %v759
    %v1377 = vunpack.c.l.b16 %v760
    %v1378 = vunpack.c.h.b16 %v760
    %v1379 = vunpack.c.l.b16 %v761
    %v1380 = vunpack.c.h.b16 %v761
    %v1381 = vunpack.c.l.b16 %v762
    %v1382 = vunpack.c.h.b16 %v762
    %v1383 = vunpack.c.l.b16 %v763
    %v1384 = vunpack.c.h.b16 %v763
    %v1385 = vunpack.c.l.b16 %v764
    %v1386 = vunpack.c.h.b16 %v764
    %v1387 = vunpack.c.l.b16 %v765
    %v1388 = vunpack.c.h.b16 %v765
    %v1389 = vunpack.c.l.b16 %v766
    %v1390 = vunpack.c.h.b16 %v766
    %v1391 = vunpack.c.l.b16 %v767
    %v1392 = vunpack.c.h.b16 %v767
    %v1393 = vunpack.c.l.b16 %v768
    %v1394 = vunpack.c.h.b16 %v768
    %v1395 = vunpack.c.l.b16 %v769
    %v1396 = vunpack.c.h.b16 %v769
    %v1397 = vunpack.c.l.b16 %v770
    %v1398 = vunpack.c.h.b16 %v770
    %v1399 = vunpack.c.l.b16 %v771
    %v1400 = vunpack.c.h.b16 %v771
    %v1401 = vunpack.c.l.b16 %v772
    %v1402 = vunpack.c.h.b16 %v772
    %v1403 = vunpack.c.l.b16 %v773
    %v1404 = vunpack.c.h.b16 %v773
    %v1405 = vunpack.c.l.b16 %v774
    %v1406 = vunpack.c.h.b16 %v774
    %v1407 = vunpack.c.l.b16 %v775
    %v1408 = vunpack.c.h.b16 %v775
    %v1409 = vunpack.c.l.b16 %v776
    %v1410 = vunpack.c.h.b16 %v776
    %v1411 = vunpack.c.l.b16 %v777
    %v1412 = vunpack.c.h.b16 %v777
    %v1413 = vunpack.c.l.b16 %v778
    %v1414 = vunpack.c.h.b16 %v778
    %v1415 = vunpack.c.l.b16 %v779
    %v1416 = vunpack.c.h.b16 %v779
    %v1417 = vunpack.c.l.b16 %v780
    %v1418 = vunpack.c.h.b16 %v780
    %v1419 = vunpack.c.l.b16 %v781
    %v1420 = vunpack.c.h.b16 %v781
    %v1421 = vunpack.c.l.b16 %v782
    %v1422 = vunpack.c.h.b16 %v782
    %v1423 = vunpack.c.l.b16 %v783
    %v1424 = vunpack.c.h.b16 %v783
    %v1425 = vunpack.c.l.b16 %v784
    %v1426 = vunpack.c.h.b16 %v784
    %v1427 = vunpack.c.l.b16 %v785
    %v1428 = vunpack.c.h.b16 %v785
    %v1429 = vunpack.c.l.b16 %v786
    %v1430 = vunpack.c.h.b16 %v786
    %v1431 = vunpack.c.l.b16 %v787
    %v1432 = vunpack.c.h.b16 %v787
    %v1433 = vunpack.c.l.b16 %v788
    %v1434 = vunpack.c.h.b16 %v788
    %v1435 = vunpack.c.l.b16 %v789
    %v1436 = vunpack.c.h.b16 %v789
    %v1437 = vunpack.c.l.b16 %v790
    %v1438 = vunpack.c.h.b16 %v790
    %v1439 = vunpack.c.l.b16 %v791
    %v1440 = vunpack.c.h.b16 %v791
    %v1441 = vunpack.c.l.b16 %v792
    %v1442 = vunpack.c.h.b16 %v792
    %v1443 = vunpack.c.l.b16 %v793
    %v1444 = vunpack.c.h.b16 %v793
    %v1445 = vunpack.c.l.b16 %v794
    %v1446 = vunpack.c.h.b16 %v794
    %v1447 = vunpack.c.l.b16 %v795
    %v1448 = vunpack.c.h.b16 %v795
    %v1449 = vunpack.c.l.b16 %v796
    %v1450 = vunpack.c.h.b16 %v796
    %v1451 = vunpack.c.l.b16 %v797
    %v1452 = vunpack.c.h.b16 %v797
    %v1453 = vunpack.c.l.b16 %v798
    %v1454 = vunpack.c.h.b16 %v798
    %v1455 = vunpack.c.l.b16 %v799
    %v1456 = vunpack.c.h.b16 %v799
    %v1457 = vunpack.c.l.b16 %v800
    %v1458 = vunpack.c.h.b16 %v800
    %v1459 = vunpack.c.l.b16 %v801
    %v1460 = vunpack.c.h.b16 %v801
    %v1461 = vunpack.c.l.b16 %v802
    %v1462 = vunpack.c.h.b16 %v802
    %v1463 = vunpack.c.l.b16 %v803
    %v1464 = vunpack.c.h.b16 %v803
    %v1465 = vunpack.c.l.b16 %v804
    %v1466 = vunpack.c.h.b16 %v804
    %v1467 = vunpack.c.l.b16 %v805
    %v1468 = vunpack.c.h.b16 %v805
    %v1469 = vunpack.c.l.b16 %v806
    %v1470 = vunpack.c.h.b16 %v806
    %v1471 = vunpack.c.l.b16 %v807
    %v1472 = vunpack.c.h.b16 %v807
    %v1473 = vunpack.c.l.b16 %v808
    %v1474 = vunpack.c.h.b16 %v808
    %v1475 = vunpack.c.l.b16 %v809
    %v1476 = vunpack.c.h.b16 %v809
    %v1477 = vunpack.c.l.b16 %v810
    %v1478 = vunpack.c.h.b16 %v810
    %v1479 = vunpack.c.l.b16 %v811
    %v1480 = vunpack.c.h.b16 %v811
    %v1481 = vunpack.c.l.b16 %v812
    %v1482 = vunpack.c.h.b16 %v812
    %v1483 = vunpack.c.l.b16 %v813
    %v1484 = vunpack.c.h.b16 %v813
    %v1485 = vunpack.c.l.b16 %v814
    %v1486 = vunpack.c.h.b16 %v814
    %v1487 = vunpack.c.l.b16 %v815
    %v1488 = vunpack.c.h.b16 %v815
    %v1489 = vunpack.c.l.b16 %v816
    %v1490 = vunpack.c.h.b16 %v816
    %v1491 = vunpack.c.l.b16 %v817
    %v1492 = vunpack.c.h.b16 %v817
    %v1493 = vunpack.c.l.b16 %v818
    %v1494 = vunpack.c.h.b16 %v818
    %v1495 = vunpack.c.l.b16 %v819
    %v1496 = vunpack.c.h.b16 %v819
    %v1497 = vunpack.c.l.b16 %v820
    %v1498 = vunpack.c.h.b16 %v820
    %v1499 = vunpack.c.l.b16 %v821
    %v1500 = vunpack.c.h.b16 %v821
    %v1501 = vunpack.c.l.b16 %v822
    %v1502 = vunpack.c.h.b16 %v822
    %v1503 = vunpack.c.l.b16 %v823
    %v1504 = vunpack.c.h.b16 %v823
    %v1505 = vunpack.c.l.b16 %v824
    %v1506 = vunpack.c.h.b16 %v824
    %v1507 = vunpack.c.l.b16 %v825
    %v1508 = vunpack.c.h.b16 %v825
    %v1509 = vunpack.c.l.b16 %v826
    %v1510 = vunpack.c.h.b16 %v826
    %v1511 = vunpack.c.l.b16 %v827
    %v1512 = vunpack.c.h.b16 %v827
    %v1513 = vunpack.c.l.b16 %v828
    %v1514 = vunpack.c.h.b16 %v828
    %v1515 = vunpack.c.l.b16 %v829
    %v1516 = vunpack.c.h.b16 %v829
    %v1517 = vunpack.c.l.b16 %v830
    %v1518 = vunpack.c.h.b16 %v830
    %v1519 = vunpack.c.l.b16 %v831
    %v1520 = vunpack.c.h.b16 %v831
    %v1521 = vunpack.c.l.b16 %v832
    %v1522 = vunpack.c.h.b16 %v832
    %v1523 = vunpack.c.l.b16 %v833
    %v1524 = vunpack.c.h.b16 %v833
    %v1525 = vunpack.c.l.b16 %v834
    %v1526 = vunpack.c.h.b16 %v834
    %v1527 = vunpack.c.l.b16 %v835
    %v1528 = vunpack.c.h.b16 %v835
    %v1529 = vunpack.c.l.b16 %v836
    %v1530 = vunpack.c.h.b16 %v836
    %v1531 = vunpack.c.l.b16 %v837
    %v1532 = vunpack.c.h.b16 %v837
    %v1533 = vunpack.c.l.b16 %v838
    %v1534 = vunpack.c.h.b16 %v838
    %v1535 = vunpack.c.l.b16 %v839
    %v1536 = vunpack.c.h.b16 %v839
    %v1537 = vunpack.c.l.b16 %v840
    %v1538 = vunpack.c.h.b16 %v840
    %v1539 = vunpack.c.l.b16 %v841
    %v1540 = vunpack.c.h.b16 %v841
    %v1541 = vunpack.c.l.b16 %v842
    %v1542 = vunpack.c.h.b16 %v842
    %v1543 = vunpack.c.l.b16 %v843
    %v1544 = vunpack.c.h.b16 %v843
    %v1545 = vunpack.c.l.b16 %v844
    %v1546 = vunpack.c.h.b16 %v844
    %v1547 = vunpack.c.l.b16 %v845
    %v1548 = vunpack.c.h.b16 %v845
    %v1549 = vunpack.c.l.b16 %v846
    %v1550 = vunpack.c.h.b16 %v846
    %v1551 = vunpack.c.l.b16 %v847
    %v1552 = vunpack.c.h.b16 %v847
    %v1553 = vunpack.c.l.b16 %v848
    %v1554 = vunpack.c.h.b16 %v848
    %v1555 = vunpack.c.l.b16 %v849
    %v1556 = vunpack.c.h.b16 %v849
    %v1557 = vunpack.c.l.b16 %v850
    %v1558 = vunpack.c.h.b16 %v850
    %v1559 = vunpack.c.l.b16 %v851
    %v1560 = vunpack.c.h.b16 %v851
    %v1561 = vunpack.c.l.b16 %v852
    %v1562 = vunpack.c.h.b16 %v852
    %v1563 = vunpack.c.l.b16 %v853
    %v1564 = vunpack.c.h.b16 %v853
    %v1565 = vunpack.c.l.b16 %v854
    %v1566 = vunpack.c.h.b16 %v854
    %v1567 = vunpack.c.l.b16 %v855
    %v1568 = vunpack.c.h.b16 %v855
    %v1569 = vunpack.c.l.b16 %v856
    %v1570 = vunpack.c.h.b16 %v856
    %v1571 = vunpack.c.l.b16 %v857
    %v1572 = vunpack.c.h.b16 %v857
    %v1573 = vunpack.c.l.b16 %v858
    %v1574 = vunpack.c.h.b16 %v858
    %v1575 = vunpack.c.l.b16 %v859
    %v1576 = vunpack.c.h.b16 %v859
    %v1577 = vunpack.c.l.b16 %v860
    %v1578 = vunpack.c.h.b16 %v860
    %v1579 = vunpack.c.l.b16 %v861
    %v1580 = vunpack.c.h.b16 %v861
    %v1581 = vunpack.c.l.b16 %v862
    %v1582 = vunpack.c.h.b16 %v862
    %v1583 = vunpack.c.l.b16 %v863
    %v1584 = vunpack.c.h.b16 %v863
    %v1585 = vunpack.c.l.b16 %v864
    %v1586 = vunpack.c.h.b16 %v864
    %v1587 = vunpack.c.l.b16 %v865
    %v1588 = vunpack.c.h.b16 %v865
    %v1589 = vunpack.c.l.b16 %v866
    %v1590 = vunpack.c.h.b16 %v866
    %v1591 = vunpack.c.l.b16 %v867
    %v1592 = vunpack.c.h.b16 %v867
    %v1593 = vunpack.c.l.b16 %v868
    %v1594 = vunpack.c.h.b16 %v868
    %v1595 = vunpack.c.l.b16 %v869
    %v1596 = vunpack.c.h.b16 %v869
    %v1597 = vunpack.c.l.b16 %v870
    %v1598 = vunpack.c.h.b16 %v870
    %v1599 = vunpack.c.l.b16 %v871
    %v1600 = vunpack.c.h.b16 %v871
    %v1601 = vunpack.c.l.b16 %v872
    %v1602 = vunpack.c.h.b16 %v872
    %v1603 = vunpack.c.l.b16 %v873
    %v1604 = vunpack.c.h.b16 %v873
    %v1605 = vunpack.c.l.b16 %v874
    %v1606 = vunpack.c.h.b16 %v874
    %v1607 = vunpack.c.l.b16 %v875
    %v1608 = vunpack.c.h.b16 %v875
    %v1609 = vunpack.c.l.b16 %v876
    %v1610 = vunpack.c.h.b16 %v876
    %v1611 = vunpack.c.l.b16 %v877
    %v1612 = vunpack.c.h.b16 %v877
    %v1613 = vunpack.c.l.b16 %v878
    %v1614 = vunpack.c.h.b16 %v878
    %v1615 = vunpack.c.l.b16 %v879
    %v1616 = vunpack.c.h.b16 %v879
    %v1617 = vunpack.c.l.b16 %v880
    %v1618 = vunpack.c.h.b16 %v880
    %v1619 = vunpack.c.l.b16 %v881
    %v1620 = vunpack.c.h.b16 %v881
    %v1621 = vunpack.c.l.b16 %v882
    %v1622 = vunpack.c.h.b16 %v882
    %v1623 = vunpack.c.l.b16 %v883
    %v1624 = vunpack.c.h.b16 %v883
    %v1625 = vunpack.c.l.b16 %v884
    %v1626 = vunpack.c.h.b16 %v884
    %v1627 = vunpack.c.l.b16 %v885
    %v1628 = vunpack.c.h.b16 %v885
    %v1629 = vunpack.c.l.b16 %v886
    %v1630 = vunpack.c.h.b16 %v886
    %v1631 = vunpack.c.l.b16 %v887
    %v1632 = vunpack.c.h.b16 %v887
    %v1633 = vunpack.c.l.b16 %v888
    %v1634 = vunpack.c.h.b16 %v888
    %v1635 = vunpack.c.l.b16 %v889
    %v1636 = vunpack.c.h.b16 %v889
    %v1637 = vunpack.c.l.b16 %v890
    %v1638 = vunpack.c.h.b16 %v890
    %v1639 = vunpack.c.l.b16 %v891
    %v1640 = vunpack.c.h.b16 %v891
    %v1641 = vunpack.c.l.b16 %v892
    %v1642 = vunpack.c.h.b16 %v892
    %v1643 = vunpack.c.l.b16 %v893
    %v1644 = vunpack.c.h.b16 %v893
    %v1645 = vunpack.c.l.b16 %v894
    %v1646 = vunpack.c.h.b16 %v894
    %v1647 = vunpack.c.l.b16 %v895
    %v1648 = vunpack.c.h.b16 %v895
    %v1649 = vunpack.c.l.b16 %v896
    %v1650 = vunpack.c.h.b16 %v896
    %v1651 = vunpack.c.l.b16 %v897
    %v1652 = vunpack.c.h.b16 %v897
    %v1653 = vunpack.c.l.b16 %v898
    %v1654 = vunpack.c.h.b16 %v898
    %v1655 = vunpack.c.l.b16 %v899
    %v1656 = vunpack.c.h.b16 %v899
    %v1657 = vunpack.c.l.b16 %v900
    %v1658 = vunpack.c.h.b16 %v900
    %v1659 = vunpack.c.l.b16 %v901
    %v1660 = vunpack.c.h.b16 %v901
    %v1661 = vunpack.c.l.b16 %v902
    %v1662 = vunpack.c.h.b16 %v902
    %v1663 = vunpack.c.l.b16 %v903
    %v1664 = vunpack.c.h.b16 %v903
    %v1665 = vunpack.c.l.b16 %v904
    %v1666 = vunpack.c.h.b16 %v904
    %v1667 = vunpack.c.l.b16 %v905
    %v1668 = vunpack.c.h.b16 %v905
    %v1669 = vunpack.c.l.b16 %v906
    %v1670 = vunpack.c.h.b16 %v906
    %v1671 = vunpack.c.l.b16 %v907
    %v1672 = vunpack.c.h.b16 %v907
    %v1673 = vunpack.c.l.b16 %v908
    %v1674 = vunpack.c.h.b16 %v908
    %v1675 = vunpack.c.l.b16 %v909
    %v1676 = vunpack.c.h.b16 %v909
    %v1677 = vunpack.c.l.b16 %v910
    %v1678 = vunpack.c.h.b16 %v910
    %v1679 = vunpack.c.l.b16 %v911
    %v1680 = vunpack.c.h.b16 %v911
    %v1681 = vunpack.c.l.b16 %v912
    %v1682 = vunpack.c.h.b16 %v912
    %v1683 = vunpack.c.l.b16 %v913
    %v1684 = vunpack.c.h.b16 %v913
    %v1685 = vunpack.c.l.b16 %v914
    %v1686 = vunpack.c.h.b16 %v914
    %v1687 = vunpack.c.l.b16 %v915
    %v1688 = vunpack.c.h.b16 %v915
    %v1689 = vunpack.c.l.b16 %v916
    %v1690 = vunpack.c.h.b16 %v916
    %v1691 = vunpack.c.l.b16 %v917
    %v1692 = vunpack.c.h.b16 %v917
    %v1693 = vunpack.c.l.b16 %v918
    %v1694 = vunpack.c.h.b16 %v918
    %v1695 = vunpack.c.l.b16 %v919
    %v1696 = vunpack.c.h.b16 %v919
    %v1697 = vunpack.c.l.b16 %v920
    %v1698 = vunpack.c.h.b16 %v920
    %v1699 = vunpack.c.l.b16 %v921
    %v1700 = vunpack.c.h.b16 %v921
    %v1701 = vunpack.c.l.b16 %v922
    %v1702 = vunpack.c.h.b16 %v922
    %v1703 = vunpack.c.l.b16 %v923
    %v1704 = vunpack.c.h.b16 %v923
    %v1705 = vunpack.c.l.b16 %v924
    %v1706 = vunpack.c.h.b16 %v924
    %v1707 = vunpack.c.l.b16 %v925
    %v1708 = vunpack.c.h.b16 %v925
    %v1709 = vunpack.c.l.b16 %v926
    %v1710 = vunpack.c.h.b16 %v926
    %v1711 = vunpack.c.l.b16 %v927
    %v1712 = vunpack.c.h.b16 %v927
    %v1713 = vunpack.c.l.b16 %v928
    %v1714 = vunpack.c.h.b16 %v928
    %v1715 = vunpack.c.l.b16 %v929
    %v1716 = vunpack.c.h.b16 %v929
    %v1717 = vunpack.c.l.b16 %v930
    %v1718 = vunpack.c.h.b16 %v930
    %v1719 = vunpack.c.l.b16 %v931
    %v1720 = vunpack.c.h.b16 %v931
    %v1721 = vunpack.c.l.b16 %v932
    %v1722 = vunpack.c.h.b16 %v932
    %v1723 = vunpack.c.l.b16 %v933
    %v1724 = vunpack.c.h.b16 %v933
    %v1725 = vunpack.c.l.b16 %v934
    %v1726 = vunpack.c.h.b16 %v934
    %v1727 = vunpack.c.l.b16 %v935
    %v1728 = vunpack.c.h.b16 %v935
    %v1729 = vunpack.c.l.b16 %v936
    %v1730 = vunpack.c.h.b16 %v936
    %v1731 = vunpack.c.l.b16 %v937
    %v1732 = vunpack.c.h.b16 %v937
    %v1733 = vunpack.c.l.b16 %v938
    %v1734 = vunpack.c.h.b16 %v938
    %v1735 = vunpack.c.l.b16 %v939
    %v1736 = vunpack.c.h.b16 %v939
    %v1737 = vunpack.c.l.b16 %v940
    %v1738 = vunpack.c.h.b16 %v940
    %v1739 = vunpack.c.l.b16 %v941
    %v1740 = vunpack.c.h.b16 %v941
    %v1741 = vunpack.c.l.b16 %v942
    %v1742 = vunpack.c.h.b16 %v942
    %v1743 = vpack.c.b16 %v1239, %v1231
    %v1744 = vpack.c.b16 %v1240, %v1232
    %v1745 = vpack.c.b16 %v1241, %v1233
    %v1746 = vpack.c.b16 %v1242, %v1234
    %v1747 = vpack.c.b16 %v1243, %v1235
    %v1748 = vpack.c.b16 %v1244, %v1236
    %v1749 = vpack.c.b16 %v1245, %v1237
    %v1750 = vpack.c.b16 %v1246, %v1238
    %v1751 = vpack.c.b16 %v1255, %v1247
    %v1752 = vpack.c.b16 %v1256, %v1248
    %v1753 = vpack.c.b16 %v1257, %v1249
    %v1754 = vpack.c.b16 %v1258, %v1250
    %v1755 = vpack.c.b16 %v1259, %v1251
    %v1756 = vpack.c.b16 %v1260, %v1252
    %v1757 = vpack.c.b16 %v1261, %v1253
    %v1758 = vpack.c.b16 %v1262, %v1254
    %v1759 = vpack.c.b16 %v1271, %v1263
    %v1760 = vpack.c.b16 %v1272, %v1264
    %v1761 = vpack.c.b16 %v1273, %v1265
    %v1762 = vpack.c.b16 %v1274, %v1266
    %v1763 = vpack.c.b16 %v1275, %v1267
    %v1764 = vpack.c.b16 %v1276, %v1268
    %v1765 = vpack.c.b16 %v1277, %v1269
    %v1766 = vpack.c.b16 %v1278, %v1270
    %v1767 = vpack.c.b16 %v1287, %v1279
    %v1768 = vpack.c.b16 %v1288, %v1280
    %v1769 = vpack.c.b16 %v1289, %v1281
    %v1770 = vpack.c.b16 %v1290, %v1282
    %v1771 = vpack.c.b16 %v1291, %v1283
    %v1772 = vpack.c.b16 %v1292, %v1284
    %v1773 = vpack.c.b16 %v1293, %v1285
    %v1774 = vpack.c.b16 %v1294, %v1286
    %v1775 = vpack.c.b16 %v1303, %v1295
    %v1776 = vpack.c.b16 %v1304, %v1296
    %v1777 = vpack.c.b16 %v1305, %v1297
    %v1778 = vpack.c.b16 %v1306, %v1298
    %v1779 = vpack.c.b16 %v1307, %v1299
    %v1780 = vpack.c.b16 %v1308, %v1300
    %v1781 = vpack.c.b16 %v1309, %v1301
    %v1782 = vpack.c.b16 %v1310, %v1302
    %v1783 = vpack.c.b16 %v1319, %v1311
    %v1784 = vpack.c.b16 %v1320, %v1312
    %v1785 = vpack.c.b16 %v1321, %v1313
    %v1786 = vpack.c.b16 %v1322, %v1314
    %v1787 = vpack.c.b16 %v1323, %v1315
    %v1788 = vpack.c.b16 %v1324, %v1316
    %v1789 = vpack.c.b16 %v1325, %v1317
    %v1790 = vpack.c.b16 %v1326, %v1318
    %v1791 = vpack.c.b16 %v1335, %v1327
    %v1792 = vpack.c.b16 %v1336, %v1328
    %v1793 = vpack.c.b16 %v1337, %v1329
    %v1794 = vpack.c.b16 %v1338, %v1330
    %v1795 = vpack.c.b16 %v1339, %v1331
    %v1796 = vpack.c.b16 %v1340, %v1332
    %v1797 = vpack.c.b16 %v1341, %v1333
    %v1798 = vpack.c.b16 %v1342, %v1334
    %v1799 = vpack.c.b16 %v1351, %v1343
    %v1800 = vpack.c.b16 %v1352, %v1344
    %v1801 = vpack.c.b16 %v1353, %v1345
    %v1802 = vpack.c.b16 %v1354, %v1346
    %v1803 = vpack.c.b16 %v1355, %v1347
    %v1804 = vpack.c.b16 %v1356, %v1348
    %v1805 = vpack.c.b16 %v1357, %v1349
    %v1806 = vpack.c.b16 %v1358, %v1350
    %v1807 = vpack.c.b16 %v1367, %v1359
    %v1808 = vpack.c.b16 %v1368, %v1360
    %v1809 = vpack.c.b16 %v1369, %v1361
    %v1810 = vpack.c.b16 %v1370, %v1362
    %v1811 = vpack.c.b16 %v1371, %v1363
    %v1812 = vpack.c.b16 %v1372, %v1364
    %v1813 = vpack.c.b16 %v1373, %v1365
    %v1814 = vpack.c.b16 %v1374, %v1366
    %v1815 = vpack.c.b16 %v1383, %v1375
    %v1816 = vpack.c.b16 %v1384, %v1376
    %v1817 = vpack.c.b16 %v1385, %v1377
    %v1818 = vpack.c.b16 %v1386, %v1378
    %v1819 = vpack.c.b16 %v1387, %v1379
    %v1820 = vpack.c.b16 %v1388, %v1380
    %v1821 = vpack.c.b16 %v1389, %v1381
    %v1822 = vpack.c.b16 %v1390, %v1382
    %v1823 = vpack.c.b16 %v1399, %v1391
    %v1824 = vpack.c.b16 %v1400, %v1392
    %v1825 = vpack.c.b16 %v1401, %v1393
    %v1826 = vpack.c.b16 %v1402, %v1394
    %v1827 = vpack.c.b16 %v1403, %v1395
    %v1828 = vpack.c.b16 %v1404, %v1396
    %v1829 = vpack.c.b16 %v1405, %v1397
    %v1830 = vpack.c.b16 %v1406, %v1398
    %v1831 = vpack.c.b16 %v1415, %v1407
    %v1832 = vpack.c.b16 %v1416, %v1408
    %v1833 = vpack.c.b16 %v1417, %v1409
    %v1834 = vpack.c.b16 %v1418, %v1410
    %v1835 = vpack.c.b16 %v1419, %v1411
    %v1836 = vpack.c.b16 %v1420, %v1412
    %v1837 = vpack.c.b16 %v1421, %v1413
    %v1838 = vpack.c.b16 %v1422, %v1414
    %v1839 = vpack.c.b16 %v1431, %v1423
    %v1840 = vpack.c.b16 %v1432, %v1424
    %v1841 = vpack.c.b16 %v1433, %v1425
    %v1842 = vpack.c.b16 %v1434, %v1426
    %v1843 = vpack.c.b16 %v1435, %v1427
    %v1844 = vpack.c.b16 %v1436, %v1428
    %v1845 = vpack.c.b16 %v1437, %v1429
    %v1846 = vpack.c.b16 %v1438, %v1430
    %v1847 = vpack.c.b16 %v1447, %v1439
    %v1848 = vpack.c.b16 %v1448, %v1440
    %v1849 = vpack.c.b16 %v1449, %v1441
    %v1850 = vpack.c.b16 %v1450, %v1442
    %v1851 = vpack.c.b16 %v1451, %v1443
    %v1852 = vpack.c.b16 %v1452, %v1444
    %v1853 = vpack.c.b16 %v1453, %v1445
    %v1854 = vpack.c.b16 %v1454, %v1446
    %v1855 = vpack.c.b16 %v1463, %v1455
    %v1856 = vpack.c.b16 %v1464, %v1456
    %v1857 = vpack.c.b16 %v1465, %v1457
    %v1858 = vpack.c.b16 %v1466, %v1458
    %v1859 = vpack.c.b16 %v1467, %v1459
    %v1860 = vpack.c.b16 %v1468, %v1460
    %v1861 = vpack.c.b16 %v1469, %v1461
    %v1862 = vpack.c.b16 %v1470, %v1462
    %v1863 = vpack.c.b16 %v1479, %v1471
    %v1864 = vpack.c.b16 %v1480, %v1472
    %v1865 = vpack.c.b16 %v1481, %v1473
    %v1866 = vpack.c.b16 %v1482, %v1474
    %v1867 = vpack.c.b16 %v1483, %v1475
    %v1868 = vpack.c.b16 %v1484, %v1476
    %v1869 = vpack.c.b16 %v1485, %v1477
    %v1870 = vpack.c.b16 %v1486, %v1478
    %v1871 = vpack.c.b16 %v1495, %v1487
    %v1872 = vpack.c.b16 %v1496, %v1488
    %v1873 = vpack.c.b16 %v1497, %v1489
    %v1874 = vpack.c.b16 %v1498, %v1490
    %v1875 = vpack.c.b16 %v1499, %v1491
    %v1876 = vpack.c.b16 %v1500, %v1492
    %v1877 = vpack.c.b16 %v1501, %v1493
    %v1878 = vpack.c.b16 %v1502, %v1494
    %v1879 = vpack.c.b16 %v1511, %v1503
    %v1880 = vpack.c.b16 %v1512, %v1504
    %v1881 = vpack.c.b16 %v1513, %v1505
    %v1882 = vpack.c.b16 %v1514, %v1506
    %v1883 = vpack.c.b16 %v1515, %v1507
    %v1884 = vpack.c.b16 %v1516, %v1508
    %v1885 = vpack.c.b16 %v1517, %v1509
    %v1886 = vpack.c.b16 %v1518, %v1510
    %v1887 = vpack.c.b16 %v1527, %v1519
    %v1888 = vpack.c.b16 %v1528, %v1520
    %v1889 = vpack.c.b16 %v1529, %v1521
    %v1890 = vpack.c.b16 %v1530, %v1522
    %v1891 = vpack.c.b16 %v1531, %v1523
    %v1892 = vpack.c.b16 %v1532, %v1524
    %v1893 = vpack.c.b16 %v1533, %v1525
    %v1894 = vpack.c.b16 %v1534, %v1526
    %v1895 = vpack.c.b16 %v1543, %v1535
    %v1896 = vpack.c.b16 %v1544, %v1536
    %v1897 = vpack.c.b16 %v1545, %v1537
    %v1898 = vpack.c.b16 %v1546, %v1538
    %v1899 = vpack.c.b16 %v1547, %v1539
    %v1900 = vpack.c.b16 %v1548, %v1540
    %v1901 = vpack.c.b16 %v1549, %v1541
    %v1902 = vpack.c.b16 %v1550, %v1542
    %v1903 = vpack.c.b16 %v1559, %v1551
    %v1904 = vpack.c.b16 %v1560, %v1552
    %v1905 = vpack.c.b16 %v1561, %v1553
    %v1906 = vpack.c.b16 %v1562, %v1554
    %v1907 = vpack.c.b16 %v1563, %v1555
    %v1908 = vpack.c.b16 %v1564, %v1556
    %v1909 = vpack.c.b16 %v1565, %v1557
    %v1910 = vpack.c.b16 %v1566, %v1558
    %v1911 = vpack.c.b16 %v1575, %v1567
    %v1912 = vpack.c.b16 %v1576, %v1568
    %v1913 = vpack.c.b16 %v1577, %v1569
    %v1914 = vpack.c.b16 %v1578, %v1570
    %v1915 = vpack.c.b16 %v1579, %v1571
    %v1916 = vpack.c.b16 %v1580, %v1572
    %v1917 = vpack.c.b16 %v1581, %v1573
    %v1918 = vpack.c.b16 %v1582, %v1574
    %v1919 = vpack.c.b16 %v1591, %v1583
    %v1920 = vpack.c.b16 %v1592, %v1584
    %v1921 = vpack.c.b16 %v1593, %v1585
    %v1922 = vpack.c.b16 %v1594, %v1586
    %v1923 = vpack.c.b16 %v1595, %v1587
    %v1924 = vpack.c.b16 %v1596, %v1588
    %v1925 = vpack.c.b16 %v1597, %v1589
    %v1926 = vpack.c.b16 %v1598, %v1590
    %v1927 = vpack.c.b16 %v1607, %v1599
    %v1928 = vpack.c.b16 %v1608, %v1600
    %v1929 = vpack.c.b16 %v1609, %v1601
    %v1930 = vpack.c.b16 %v1610, %v1602
    %v1931 = vpack.c.b16 %v1611, %v1603
    %v1932 = vpack.c.b16 %v1612, %v1604
    %v1933 = vpack.c.b16 %v1613, %v1605
    %v1934 = vpack.c.b16 %v1614, %v1606
    %v1935 = vpack.c.b16 %v1623, %v1615
    %v1936 = vpack.c.b16 %v1624, %v1616
    %v1937 = vpack.c.b16 %v1625, %v1617
    %v1938 = vpack.c.b16 %v1626, %v1618
    %v1939 = vpack.c.b16 %v1627, %v1619
    %v1940 = vpack.c.b16 %v1628, %v1620
    %v1941 = vpack.c.b16 %v1629, %v1621
    %v1942 = vpack.c.b16 %v1630, %v1622
    %v1943 = vpack.c.b16 %v1639, %v1631
    %v1944 = vpack.c.b16 %v1640, %v1632
    %v1945 = vpack.c.b16 %v1641, %v1633
    %v1946 = vpack.c.b16 %v1642, %v1634
    %v1947 = vpack.c.b16 %v1643, %v1635
    %v1948 = vpack.c.b16 %v1644, %v1636
    %v1949 = vpack.c.b16 %v1645, %v1637
    %v1950 = vpack.c.b16 %v1646, %v1638
    %v1951 = vpack.c.b16 %v1655, %v1647
    %v1952 = vpack.c.b16 %v1656, %v1648
    %v1953 = vpack.c.b16 %v1657, %v1649
    %v1954 = vpack.c.b16 %v1658, %v1650
    %v1955 = vpack.c.b16 %v1659, %v1651
    %v1956 = vpack.c.b16 %v1660, %v1652
    %v1957 = vpack.c.b16 %v1661, %v1653
    %v1958 = vpack.c.b16 %v1662, %v1654
    %v1959 = vpack.c.b16 %v1671, %v1663
    %v1960 = vpack.c.b16 %v1672, %v1664
    %v1961 = vpack.c.b16 %v1673, %v1665
    %v1962 = vpack.c.b16 %v1674, %v1666
    %v1963 = vpack.c.b16 %v1675, %v1667
    %v1964 = vpack.c.b16 %v1676, %v1668
    %v1965 = vpack.c.b16 %v1677, %v1669
    %v1966 = vpack.c.b16 %v1678, %v1670
    %v1967 = vpack.c.b16 %v1687, %v1679
    %v1968 = vpack.c.b16 %v1688, %v1680
    %v1969 = vpack.c.b16 %v1689, %v1681
    %v1970 = vpack.c.b16 %v1690, %v1682
    %v1971 = vpack.c.b16 %v1691, %v1683
    %v1972 = vpack.c.b16 %v1692, %v1684
    %v1973 = vpack.c.b16 %v1693, %v1685
    %v1974 = vpack.c.b16 %v1694, %v1686
    %v1975 = vpack.c.b16 %v1703, %v1695
    %v1976 = vpack.c.b16 %v1704, %v1696
    %v1977 = vpack.c.b16 %v1705, %v1697
    %v1978 = vpack.c.b16 %v1706, %v1698
    %v1979 = vpack.c.b16 %v1707, %v1699
    %v1980 = vpack.c.b16 %v1708, %v1700
    %v1981 = vpack.c.b16 %v1709, %v1701
    %v1982 = vpack.c.b16 %v1710, %v1702
    %v1983 = vpack.c.b16 %v1719, %v1711
    %v1984 = vpack.c.b16 %v1720, %v1712
    %v1985 = vpack.c.b16 %v1721, %v1713
    %v1986 = vpack.c.b16 %v1722, %v1714
    %v1987 = vpack.c.b16 %v1723, %v1715
    %v1988 = vpack.c.b16 %v1724, %v1716
    %v1989 = vpack.c.b16 %v1725, %v1717
    %v1990 = vpack.c.b16 %v1726, %v1718
    %v1991 = vpack.c.b16 %v1735, %v1727
    %v1992 = vpack.c.b16 %v1736, %v1728
    %v1993 = vpack.c.b16 %v1737, %v1729
    %v1994 = vpack.c.b16 %v1738, %v1730
    %v1995 = vpack.c.b16 %v1739, %v1731
    %v1996 = vpack.c.b16 %v1740, %v1732
    %v1997 = vpack.c.b16 %v1741, %v1733
    %v1998 = vpack.c.b16 %v1742, %v1734
    %2255 = vmatprep.subr.bf16.mxu0 %v1744
    %2256 = vmatpush1.bf16.msra.mxu0 %v1743
    %2257 = vmatprep.subr.bf16.mxu0 %v1752
    %2258 = vmatpush1.bf16.msra.mxu0 %v1751
    %2259 = vmatprep.subr.bf16.mxu0 %v1760
    %2260 = vmatpush1.bf16.msra.mxu0 %v1759
    %2261 = vmatprep.subr.bf16.mxu0 %v1768
    %2262 = vmatpush1.bf16.msra.mxu0 %v1767
    %2263 = vmatprep.subr.bf16.mxu0 %v1776
    %2264 = vmatpush1.bf16.msra.mxu0 %v1775
    %2265 = vmatprep.subr.bf16.mxu0 %v1784
    %2266 = vmatpush1.bf16.msra.mxu0 %v1783
    %2267 = vmatprep.subr.bf16.mxu0 %v1792
    %2268 = vmatpush1.bf16.msra.mxu0 %v1791
    %2269 = vmatprep.subr.bf16.mxu0 %v1800
    %2270 = vmatpush1.bf16.msra.mxu0 %v1799
    %2271 = vmatprep.subr.bf16.mxu0 %v1808
    %2272 = vmatpush1.bf16.msra.mxu0 %v1807
    %2273 = vmatprep.subr.bf16.mxu0 %v1816
    %2274 = vmatpush1.bf16.msra.mxu0 %v1815
    %2275 = vmatprep.subr.bf16.mxu0 %v1824
    %2276 = vmatpush1.bf16.msra.mxu0 %v1823
    %2277 = vmatprep.subr.bf16.mxu0 %v1832
    %2278 = vmatpush1.bf16.msra.mxu0 %v1831
    %2279 = vmatprep.subr.bf16.mxu0 %v1840
    %2280 = vmatpush1.bf16.msra.mxu0 %v1839
    %2281 = vmatprep.subr.bf16.mxu0 %v1848
    %2282 = vmatpush1.bf16.msra.mxu0 %v1847
    %2283 = vmatprep.subr.bf16.mxu0 %v1856
    %2284 = vmatpush1.bf16.msra.mxu0 %v1855
    %2285 = vmatprep.subr.bf16.mxu0 %v1864
    %2286 = vmatpush1.bf16.msra.mxu0 %v1863
    %2287 = vmatprep.mubr.bf16.mxu0 %v684
    %2288 = vmatmul.mubr.bf16.gmra.mrb[0].mxu0 %v683
    %v2289 = vpop.f32.mrb[0].mxu0
    %v2290 = vadd.f32 %v946, %v2289
    %v2291 = vpop.f32.mrb[0].mxu0
    %v2292 = vadd.f32 %v950, %v2291
    %v2293 = vpop.f32.mrb[0].mxu0
    %v2294 = vpop.f32.mrb[0].mxu0
    %2295 = vdwg.mxu0
    %2296 = vmatprep.subr.bf16.mxu0 %v1872
    %2297 = vmatpush1.bf16.msra.mxu0 %v1871
    %2298 = vmatprep.subr.bf16.mxu0 %v1880
    %2299 = vmatpush1.bf16.msra.mxu0 %v1879
    %2300 = vmatprep.subr.bf16.mxu0 %v1888
    %2301 = vmatpush1.bf16.msra.mxu0 %v1887
    %2302 = vmatprep.subr.bf16.mxu0 %v1896
    %2303 = vmatpush1.bf16.msra.mxu0 %v1895
    %2304 = vmatprep.subr.bf16.mxu0 %v1904
    %2305 = vmatpush1.bf16.msra.mxu0 %v1903
    %2306 = vmatprep.subr.bf16.mxu0 %v1912
    %2307 = vmatpush1.bf16.msra.mxu0 %v1911
    %2308 = vmatprep.subr.bf16.mxu0 %v1920
    %2309 = vmatpush1.bf16.msra.mxu0 %v1919
    %2310 = vmatprep.subr.bf16.mxu0 %v1928
    %2311 = vmatpush1.bf16.msra.mxu0 %v1927
    %2312 = vmatprep.subr.bf16.mxu0 %v1936
    %2313 = vmatpush1.bf16.msra.mxu0 %v1935
    %2314 = vmatprep.subr.bf16.mxu0 %v1944
    %2315 = vmatpush1.bf16.msra.mxu0 %v1943
    %2316 = vmatprep.subr.bf16.mxu0 %v1952
    %2317 = vmatpush1.bf16.msra.mxu0 %v1951
    %2318 = vmatprep.subr.bf16.mxu0 %v1960
    %2319 = vmatpush1.bf16.msra.mxu0 %v1959
    %2320 = vmatprep.subr.bf16.mxu0 %v1968
    %2321 = vmatpush1.bf16.msra.mxu0 %v1967
    %2322 = vmatprep.subr.bf16.mxu0 %v1976
    %2323 = vmatpush1.bf16.msra.mxu0 %v1975
    %2324 = vmatprep.subr.bf16.mxu0 %v1984
    %2325 = vmatpush1.bf16.msra.mxu0 %v1983
    %2326 = vmatprep.subr.bf16.mxu0 %v1992
    %2327 = vmatpush1.bf16.msra.mxu0 %v1991
    %2328 = vmatprep.mubr.bf16.mxu0 %v686
    %2329 = vmatmul.mubr.bf16.gmra.mrb[0].mxu0 %v685
    %v2330 = vpop.f32.mrb[0].mxu0
    %v2331 = vadd.f32 %v2290, %v2330
    %v2332 = vpop.f32.mrb[0].mxu0
    %v2333 = vadd.f32 %v2292, %v2332
    %v2334 = vpop.f32.mrb[0].mxu0
    %v2335 = vpop.f32.mrb[0].mxu0
    %2336 = vdwg.mxu0
    %2337 = vmatprep.subr.bf16.mxu0 %v1746
    %2338 = vmatpush1.bf16.msra.mxu0 %v1745
    %2339 = vmatprep.subr.bf16.mxu0 %v1754
    %2340 = vmatpush1.bf16.msra.mxu0 %v1753
    %2341 = vmatprep.subr.bf16.mxu0 %v1762
    %2342 = vmatpush1.bf16.msra.mxu0 %v1761
    %2343 = vmatprep.subr.bf16.mxu0 %v1770
    %2344 = vmatpush1.bf16.msra.mxu0 %v1769
    %2345 = vmatprep.subr.bf16.mxu0 %v1778
    %2346 = vmatpush1.bf16.msra.mxu0 %v1777
    %2347 = vmatprep.subr.bf16.mxu0 %v1786
    %2348 = vmatpush1.bf16.msra.mxu0 %v1785
    %2349 = vmatprep.subr.bf16.mxu0 %v1794
    %2350 = vmatpush1.bf16.msra.mxu0 %v1793
    %2351 = vmatprep.subr.bf16.mxu0 %v1802
    %2352 = vmatpush1.bf16.msra.mxu0 %v1801
    %2353 = vmatprep.subr.bf16.mxu0 %v1810
    %2354 = vmatpush1.bf16.msra.mxu0 %v1809
    %2355 = vmatprep.subr.bf16.mxu0 %v1818
    %2356 = vmatpush1.bf16.msra.mxu0 %v1817
    %2357 = vmatprep.subr.bf16.mxu0 %v1826
    %2358 = vmatpush1.bf16.msra.mxu0 %v1825
    %2359 = vmatprep.subr.bf16.mxu0 %v1834
    %2360 = vmatpush1.bf16.msra.mxu0 %v1833
    %2361 = vmatprep.subr.bf16.mxu0 %v1842
    %2362 = vmatpush1.bf16.msra.mxu0 %v1841
    %2363 = vmatprep.subr.bf16.mxu0 %v1850
    %2364 = vmatpush1.bf16.msra.mxu0 %v1849
    %2365 = vmatprep.subr.bf16.mxu0 %v1858
    %2366 = vmatpush1.bf16.msra.mxu0 %v1857
    %2367 = vmatprep.subr.bf16.mxu0 %v1866
    %2368 = vmatpush1.bf16.msra.mxu0 %v1865
    %2369 = vmatprep.mubr.bf16.mxu0 %v684
    %2370 = vmatmul.mubr.bf16.gmra.mrb[0].mxu0 %v683
    %v2371 = vpop.f32.mrb[0].mxu0
    %v2372 = vadd.f32 %v954, %v2371
    %v2373 = vpop.f32.mrb[0].mxu0
    %v2374 = vadd.f32 %v958, %v2373
    %v2375 = vpop.f32.mrb[0].mxu0
    %v2376 = vpop.f32.mrb[0].mxu0
    %2377 = vdwg.mxu0
    %2378 = vmatprep.subr.bf16.mxu0 %v1874
    %2379 = vmatpush1.bf16.msra.mxu0 %v1873
    %2380 = vmatprep.subr.bf16.mxu0 %v1882
    %2381 = vmatpush1.bf16.msra.mxu0 %v1881
    %2382 = vmatprep.subr.bf16.mxu0 %v1890
    %2383 = vmatpush1.bf16.msra.mxu0 %v1889
    %2384 = vmatprep.subr.bf16.mxu0 %v1898
    %2385 = vmatpush1.bf16.msra.mxu0 %v1897
    %2386 = vmatprep.subr.bf16.mxu0 %v1906
    %2387 = vmatpush1.bf16.msra.mxu0 %v1905
    %2388 = vmatprep.subr.bf16.mxu0 %v1914
    %2389 = vmatpush1.bf16.msra.mxu0 %v1913
    %2390 = vmatprep.subr.bf16.mxu0 %v1922
    %2391 = vmatpush1.bf16.msra.mxu0 %v1921
    %2392 = vmatprep.subr.bf16.mxu0 %v1930
    %2393 = vmatpush1.bf16.msra.mxu0 %v1929
    %2394 = vmatprep.subr.bf16.mxu0 %v1938
    %2395 = vmatpush1.bf16.msra.mxu0 %v1937
    %2396 = vmatprep.subr.bf16.mxu0 %v1946
    %2397 = vmatpush1.bf16.msra.mxu0 %v1945
    %2398 = vmatprep.subr.bf16.mxu0 %v1954
    %2399 = vmatpush1.bf16.msra.mxu0 %v1953
    %2400 = vmatprep.subr.bf16.mxu0 %v1962
    %2401 = vmatpush1.bf16.msra.mxu0 %v1961
    %2402 = vmatprep.subr.bf16.mxu0 %v1970
    %2403 = vmatpush1.bf16.msra.mxu0 %v1969
    %2404 = vmatprep.subr.bf16.mxu0 %v1978
    %2405 = vmatpush1.bf16.msra.mxu0 %v1977
    %2406 = vmatprep.subr.bf16.mxu0 %v1986
    %2407 = vmatpush1.bf16.msra.mxu0 %v1985
    %2408 = vmatprep.subr.bf16.mxu0 %v1994
    %2409 = vmatpush1.bf16.msra.mxu0 %v1993
    %2410 = vmatprep.mubr.bf16.mxu0 %v686
    %2411 = vmatmul.mubr.bf16.gmra.mrb[0].mxu0 %v685
    %v2412 = vpop.f32.mrb[0].mxu0
    %v2413 = vadd.f32 %v2372, %v2412
    %v2414 = vpop.f32.mrb[0].mxu0
    %v2415 = vadd.f32 %v2374, %v2414
    %v2416 = vpop.f32.mrb[0].mxu0
    %v2417 = vpop.f32.mrb[0].mxu0
    %2418 = vdwg.mxu0
    %2419 = vmatprep.subr.bf16.mxu0 %v1748
    %2420 = vmatpush1.bf16.msra.mxu0 %v1747
    %2421 = vmatprep.subr.bf16.mxu0 %v1756
    %2422 = vmatpush1.bf16.msra.mxu0 %v1755
    %2423 = vmatprep.subr.bf16.mxu0 %v1764
    %2424 = vmatpush1.bf16.msra.mxu0 %v1763
    %2425 = vmatprep.subr.bf16.mxu0 %v1772
    %2426 = vmatpush1.bf16.msra.mxu0 %v1771
    %2427 = vmatprep.subr.bf16.mxu0 %v1780
    %2428 = vmatpush1.bf16.msra.mxu0 %v1779
    %2429 = vmatprep.subr.bf16.mxu0 %v1788
    %2430 = vmatpush1.bf16.msra.mxu0 %v1787
    %2431 = vmatprep.subr.bf16.mxu0 %v1796
    %2432 = vmatpush1.bf16.msra.mxu0 %v1795
    %2433 = vmatprep.subr.bf16.mxu0 %v1804
    %2434 = vmatpush1.bf16.msra.mxu0 %v1803
    %2435 = vmatprep.subr.bf16.mxu0 %v1812
    %2436 = vmatpush1.bf16.msra.mxu0 %v1811
    %2437 = vmatprep.subr.bf16.mxu0 %v1820
    %2438 = vmatpush1.bf16.msra.mxu0 %v1819
    %2439 = vmatprep.subr.bf16.mxu0 %v1828
    %2440 = vmatpush1.bf16.msra.mxu0 %v1827
    %2441 = vmatprep.subr.bf16.mxu0 %v1836
    %2442 = vmatpush1.bf16.msra.mxu0 %v1835
    %2443 = vmatprep.subr.bf16.mxu0 %v1844
    %2444 = vmatpush1.bf16.msra.mxu0 %v1843
    %2445 = vmatprep.subr.bf16.mxu0 %v1852
    %2446 = vmatpush1.bf16.msra.mxu0 %v1851
    %2447 = vmatprep.subr.bf16.mxu0 %v1860
    %2448 = vmatpush1.bf16.msra.mxu0 %v1859
    %2449 = vmatprep.subr.bf16.mxu0 %v1868
    %2450 = vmatpush1.bf16.msra.mxu0 %v1867
    %2451 = vmatprep.mubr.bf16.mxu0 %v684
    %2452 = vmatmul.mubr.bf16.gmra.mrb[0].mxu0 %v683
    %v2453 = vpop.f32.mrb[0].mxu0
    %v2454 = vadd.f32 %v962, %v2453
    %v2455 = vpop.f32.mrb[0].mxu0
    %v2456 = vadd.f32 %v966, %v2455
    %v2457 = vpop.f32.mrb[0].mxu0
    %v2458 = vpop.f32.mrb[0].mxu0
    %2459 = vdwg.mxu0
    %2460 = vmatprep.subr.bf16.mxu0 %v1876
    %2461 = vmatpush1.bf16.msra.mxu0 %v1875
    %2462 = vmatprep.subr.bf16.mxu0 %v1884
    %2463 = vmatpush1.bf16.msra.mxu0 %v1883
    %2464 = vmatprep.subr.bf16.mxu0 %v1892
    %2465 = vmatpush1.bf16.msra.mxu0 %v1891
    %2466 = vmatprep.subr.bf16.mxu0 %v1900
    %2467 = vmatpush1.bf16.msra.mxu0 %v1899
    %2468 = vmatprep.subr.bf16.mxu0 %v1908
    %2469 = vmatpush1.bf16.msra.mxu0 %v1907
    %2470 = vmatprep.subr.bf16.mxu0 %v1916
    %2471 = vmatpush1.bf16.msra.mxu0 %v1915
    %2472 = vmatprep.subr.bf16.mxu0 %v1924
    %2473 = vmatpush1.bf16.msra.mxu0 %v1923
    %2474 = vmatprep.subr.bf16.mxu0 %v1932
    %2475 = vmatpush1.bf16.msra.mxu0 %v1931
    %2476 = vmatprep.subr.bf16.mxu0 %v1940
    %2477 = vmatpush1.bf16.msra.mxu0 %v1939
    %2478 = vmatprep.subr.bf16.mxu0 %v1948
    %2479 = vmatpush1.bf16.msra.mxu0 %v1947
    %2480 = vmatprep.subr.bf16.mxu0 %v1956
    %2481 = vmatpush1.bf16.msra.mxu0 %v1955
    %2482 = vmatprep.subr.bf16.mxu0 %v1964
    %2483 = vmatpush1.bf16.msra.mxu0 %v1963
    %2484 = vmatprep.subr.bf16.mxu0 %v1972
    %2485 = vmatpush1.bf16.msra.mxu0 %v1971
    %2486 = vmatprep.subr.bf16.mxu0 %v1980
    %2487 = vmatpush1.bf16.msra.mxu0 %v1979
    %2488 = vmatprep.subr.bf16.mxu0 %v1988
    %2489 = vmatpush1.bf16.msra.mxu0 %v1987
    %2490 = vmatprep.subr.bf16.mxu0 %v1996
    %2491 = vmatpush1.bf16.msra.mxu0 %v1995
    %2492 = vmatprep.mubr.bf16.mxu0 %v686
    %2493 = vmatmul.mubr.bf16.gmra.mrb[0].mxu0 %v685
    %v2494 = vpop.f32.mrb[0].mxu0
    %v2495 = vadd.f32 %v2454, %v2494
    %v2496 = vpop.f32.mrb[0].mxu0
    %v2497 = vadd.f32 %v2456, %v2496
    %v2498 = vpop.f32.mrb[0].mxu0
    %v2499 = vpop.f32.mrb[0].mxu0
    %2500 = vdwg.mxu0
    %2501 = vmatprep.subr.bf16.mxu0 %v1750
    %2502 = vmatpush1.bf16.msra.mxu0 %v1749
    %2503 = vmatprep.subr.bf16.mxu0 %v1758
    %2504 = vmatpush1.bf16.msra.mxu0 %v1757
    %2505 = vmatprep.subr.bf16.mxu0 %v1766
    %2506 = vmatpush1.bf16.msra.mxu0 %v1765
    %2507 = vmatprep.subr.bf16.mxu0 %v1774
    %2508 = vmatpush1.bf16.msra.mxu0 %v1773
    %2509 = vmatprep.subr.bf16.mxu0 %v1782
    %2510 = vmatpush1.bf16.msra.mxu0 %v1781
    %2511 = vmatprep.subr.bf16.mxu0 %v1790
    %2512 = vmatpush1.bf16.msra.mxu0 %v1789
    %2513 = vmatprep.subr.bf16.mxu0 %v1798
    %2514 = vmatpush1.bf16.msra.mxu0 %v1797
    %2515 = vmatprep.subr.bf16.mxu0 %v1806
    %2516 = vmatpush1.bf16.msra.mxu0 %v1805
    %2517 = vmatprep.subr.bf16.mxu0 %v1814
    %2518 = vmatpush1.bf16.msra.mxu0 %v1813
    %2519 = vmatprep.subr.bf16.mxu0 %v1822
    %2520 = vmatpush1.bf16.msra.mxu0 %v1821
    %2521 = vmatprep.subr.bf16.mxu0 %v1830
    %2522 = vmatpush1.bf16.msra.mxu0 %v1829
    %2523 = vmatprep.subr.bf16.mxu0 %v1838
    %2524 = vmatpush1.bf16.msra.mxu0 %v1837
    %2525 = vmatprep.subr.bf16.mxu0 %v1846
    %2526 = vmatpush1.bf16.msra.mxu0 %v1845
    %2527 = vmatprep.subr.bf16.mxu0 %v1854
    %2528 = vmatpush1.bf16.msra.mxu0 %v1853
    %2529 = vmatprep.subr.bf16.mxu0 %v1862
    %2530 = vmatpush1.bf16.msra.mxu0 %v1861
    %2531 = vmatprep.subr.bf16.mxu0 %v1870
    %2532 = vmatpush1.bf16.msra.mxu0 %v1869
    %2533 = vmatprep.mubr.bf16.mxu0 %v684
    %2534 = vmatmul.mubr.bf16.gmra.mrb[0].mxu0 %v683
    %v2535 = vpop.f32.mrb[0].mxu0
    %v2536 = vadd.f32 %v970, %v2535
    %v2537 = vpop.f32.mrb[0].mxu0
    %v2538 = vadd.f32 %v974, %v2537
    %v2539 = vpop.f32.mrb[0].mxu0
    %v2540 = vpop.f32.mrb[0].mxu0
    %2541 = vdwg.mxu0
    %2542 = vmatprep.subr.bf16.mxu0 %v1878
    %2543 = vmatpush1.bf16.msra.mxu0 %v1877
    %2544 = vmatprep.subr.bf16.mxu0 %v1886
    %2545 = vmatpush1.bf16.msra.mxu0 %v1885
    %2546 = vmatprep.subr.bf16.mxu0 %v1894
    %2547 = vmatpush1.bf16.msra.mxu0 %v1893
    %2548 = vmatprep.subr.bf16.mxu0 %v1902
    %2549 = vmatpush1.bf16.msra.mxu0 %v1901
    %2550 = vmatprep.subr.bf16.mxu0 %v1910
    %2551 = vmatpush1.bf16.msra.mxu0 %v1909
    %2552 = vmatprep.subr.bf16.mxu0 %v1918
    %2553 = vmatpush1.bf16.msra.mxu0 %v1917
    %2554 = vmatprep.subr.bf16.mxu0 %v1926
    %2555 = vmatpush1.bf16.msra.mxu0 %v1925
    %2556 = vmatprep.subr.bf16.mxu0 %v1934
    %2557 = vmatpush1.bf16.msra.mxu0 %v1933
    %2558 = vmatprep.subr.bf16.mxu0 %v1942
    %2559 = vmatpush1.bf16.msra.mxu0 %v1941
    %2560 = vmatprep.subr.bf16.mxu0 %v1950
    %2561 = vmatpush1.bf16.msra.mxu0 %v1949
    %2562 = vmatprep.subr.bf16.mxu0 %v1958
    %2563 = vmatpush1.bf16.msra.mxu0 %v1957
    %2564 = vmatprep.subr.bf16.mxu0 %v1966
    %2565 = vmatpush1.bf16.msra.mxu0 %v1965
    %2566 = vmatprep.subr.bf16.mxu0 %v1974
    %2567 = vmatpush1.bf16.msra.mxu0 %v1973
    %2568 = vmatprep.subr.bf16.mxu0 %v1982
    %2569 = vmatpush1.bf16.msra.mxu0 %v1981
    %2570 = vmatprep.subr.bf16.mxu0 %v1990
    %2571 = vmatpush1.bf16.msra.mxu0 %v1989
    %2572 = vmatprep.subr.bf16.mxu0 %v1998
    %2573 = vmatpush1.bf16.msra.mxu0 %v1997
    %2574 = vmatprep.mubr.bf16.mxu0 %v686
    %2575 = vmatmul.mubr.bf16.gmra.mrb[0].mxu0 %v685
    %v2576 = vpop.f32.mrb[0].mxu0
    %v2577 = vadd.f32 %v2536, %v2576
    %v2578 = vpop.f32.mrb[0].mxu0
    %v2579 = vadd.f32 %v2538, %v2578
    %v2580 = vpop.f32.mrb[0].mxu0
    %v2581 = vpop.f32.mrb[0].mxu0
    %2582 = vdwg.mxu0
    %v2583 = vmax.f32 %v2331, 0.0
    %v2584 = vmax.f32 %v2333, 0.0
    %v2585 = vmax.f32 %v2413, 0.0
    %v2586 = vmax.f32 %v2415, 0.0
    %v2587 = vmax.f32 %v2495, 0.0
    %v2588 = vmax.f32 %v2497, 0.0
    %v2589 = vmax.f32 %v2577, 0.0
    %v2590 = vmax.f32 %v2579, 0.0
    %v2591 = vpack.c.bf16 %v2583, %v2583
    %v2592 = vpack.c.bf16 %v2584, %v2584
    %v2593 = vpack.c.bf16 %v2585, %v2585
    %v2594 = vpack.c.bf16 %v2586, %v2586
    %v2595 = vpack.c.bf16 %v2587, %v2587
    %v2596 = vpack.c.bf16 %v2588, %v2588
    %v2597 = vpack.c.bf16 %v2589, %v2589
    %v2598 = vpack.c.bf16 %v2590, %v2590
    %v2599 = vld [vmem:[#allocation10] sm:$0xf]
    %v2600 = vld [vmem:[#allocation10 + $0x4] sm:$0xf]
    %v2601 = vld [vmem:[#allocation10 + $0x8] sm:$0xf]
    %v2602 = vld [vmem:[#allocation10 + $0xc] sm:$0xf]
    %v2603 = vld [vmem:[#allocation10 + $0x10] sm:$0xf]
    %v2604 = vld [vmem:[#allocation10 + $0x14] sm:$0xf]
    %v2605 = vld [vmem:[#allocation10 + $0x18] sm:$0xf]
    %v2606 = vld [vmem:[#allocation10 + $0x1c] sm:$0xf]
    %v2607 = vld [vmem:[#allocation10 + $0x20] sm:$0xf]
    %v2608 = vld [vmem:[#allocation10 + $0x24] sm:$0xf]
    %v2609 = vld [vmem:[#allocation10 + $0x28] sm:$0xf]
    %v2610 = vld [vmem:[#allocation10 + $0x2c] sm:$0xf]
    %v2611 = vld [vmem:[#allocation10 + $0x30] sm:$0xf]
    %v2612 = vld [vmem:[#allocation10 + $0x34] sm:$0xf]
    %v2613 = vld [vmem:[#allocation10 + $0x38] sm:$0xf]
    %v2614 = vld [vmem:[#allocation10 + $0x3c] sm:$0xf]
    %v2615 = vld [vmem:[#allocation10 + $0x40] sm:$0xf]
    %v2616 = vld [vmem:[#allocation10 + $0x44] sm:$0xf]
    %v2617 = vld [vmem:[#allocation10 + $0x48] sm:$0xf]
    %v2618 = vld [vmem:[#allocation10 + $0x4c] sm:$0xf]
    %v2619 = vld [vmem:[#allocation10 + $0x50] sm:$0xf]
    %v2620 = vld [vmem:[#allocation10 + $0x54] sm:$0xf]
    %v2621 = vld [vmem:[#allocation10 + $0x58] sm:$0xf]
    %v2622 = vld [vmem:[#allocation10 + $0x5c] sm:$0xf]
    %v2623 = vld [vmem:[#allocation10 + $0x60] sm:$0xf]
    %v2624 = vld [vmem:[#allocation10 + $0x64] sm:$0xf]
    %v2625 = vld [vmem:[#allocation10 + $0x68] sm:$0xf]
    %v2626 = vld [vmem:[#allocation10 + $0x6c] sm:$0xf]
    %v2627 = vld [vmem:[#allocation10 + $0x70] sm:$0xf]
    %v2628 = vld [vmem:[#allocation10 + $0x74] sm:$0xf]
    %v2629 = vld [vmem:[#allocation10 + $0x78] sm:$0xf]
    %v2630 = vld [vmem:[#allocation10 + $0x7c] sm:$0xf]
    %v2631 = vld [vmem:[#allocation10 + $0x80] sm:$0xf]
    %v2632 = vld [vmem:[#allocation10 + $0x84] sm:$0xf]
    %v2633 = vld [vmem:[#allocation10 + $0x88] sm:$0xf]
    %v2634 = vld [vmem:[#allocation10 + $0x8c] sm:$0xf]
    %v2635 = vld [vmem:[#allocation10 + $0x90] sm:$0xf]
    %v2636 = vld [vmem:[#allocation10 + $0x94] sm:$0xf]
    %v2637 = vld [vmem:[#allocation10 + $0x98] sm:$0xf]
    %v2638 = vld [vmem:[#allocation10 + $0x9c] sm:$0xf]
    %v2639 = vld [vmem:[#allocation10 + $0xa0] sm:$0xf]
    %v2640 = vld [vmem:[#allocation10 + $0xa4] sm:$0xf]
    %v2641 = vld [vmem:[#allocation10 + $0xa8] sm:$0xf]
    %v2642 = vld [vmem:[#allocation10 + $0xac] sm:$0xf]
    %v2643 = vld [vmem:[#allocation10 + $0xb0] sm:$0xf]
    %v2644 = vld [vmem:[#allocation10 + $0xb4] sm:$0xf]
    %v2645 = vld [vmem:[#allocation10 + $0xb8] sm:$0xf]
    %v2646 = vld [vmem:[#allocation10 + $0xbc] sm:$0xf]
    %v2647 = vld [vmem:[#allocation10 + $0xc0] sm:$0xf]
    %v2648 = vld [vmem:[#allocation10 + $0xc4] sm:$0xf]
    %v2649 = vld [vmem:[#allocation10 + $0xc8] sm:$0xf]
    %v2650 = vld [vmem:[#allocation10 + $0xcc] sm:$0xf]
    %v2651 = vld [vmem:[#allocation10 + $0xd0] sm:$0xf]
    %v2652 = vld [vmem:[#allocation10 + $0xd4] sm:$0xf]
    %v2653 = vld [vmem:[#allocation10 + $0xd8] sm:$0xf]
    %v2654 = vld [vmem:[#allocation10 + $0xdc] sm:$0xf]
    %v2655 = vld [vmem:[#allocation10 + $0xe0] sm:$0xf]
    %v2656 = vld [vmem:[#allocation10 + $0xe4] sm:$0xf]
    %v2657 = vld [vmem:[#allocation10 + $0xe8] sm:$0xf]
    %v2658 = vld [vmem:[#allocation10 + $0xec] sm:$0xf]
    %v2659 = vld [vmem:[#allocation10 + $0xf0] sm:$0xf]
    %v2660 = vld [vmem:[#allocation10 + $0xf4] sm:$0xf]
    %v2661 = vld [vmem:[#allocation10 + $0xf8] sm:$0xf]
    %v2662 = vld [vmem:[#allocation10 + $0xfc] sm:$0xf]
    %v2663 = vld [vmem:[#allocation10 + $0x100] sm:$0xf]
    %v2664 = vld [vmem:[#allocation10 + $0x104] sm:$0xf]
    %v2665 = vld [vmem:[#allocation10 + $0x108] sm:$0xf]
    %v2666 = vld [vmem:[#allocation10 + $0x10c] sm:$0xf]
    %v2667 = vld [vmem:[#allocation10 + $0x110] sm:$0xf]
    %v2668 = vld [vmem:[#allocation10 + $0x114] sm:$0xf]
    %v2669 = vld [vmem:[#allocation10 + $0x118] sm:$0xf]
    %v2670 = vld [vmem:[#allocation10 + $0x11c] sm:$0xf]
    %v2671 = vld [vmem:[#allocation10 + $0x120] sm:$0xf]
    %v2672 = vld [vmem:[#allocation10 + $0x124] sm:$0xf]
    %v2673 = vld [vmem:[#allocation10 + $0x128] sm:$0xf]
    %v2674 = vld [vmem:[#allocation10 + $0x12c] sm:$0xf]
    %v2675 = vld [vmem:[#allocation10 + $0x130] sm:$0xf]
    %v2676 = vld [vmem:[#allocation10 + $0x134] sm:$0xf]
    %v2677 = vld [vmem:[#allocation10 + $0x138] sm:$0xf]
    %v2678 = vld [vmem:[#allocation10 + $0x13c] sm:$0xf]
    %v2679 = vld [vmem:[#allocation10 + $0x140] sm:$0xf]
    %v2680 = vld [vmem:[#allocation10 + $0x144] sm:$0xf]
    %v2681 = vld [vmem:[#allocation10 + $0x148] sm:$0xf]
    %v2682 = vld [vmem:[#allocation10 + $0x14c] sm:$0xf]
    %v2683 = vld [vmem:[#allocation10 + $0x150] sm:$0xf]
    %v2684 = vld [vmem:[#allocation10 + $0x154] sm:$0xf]
    %v2685 = vld [vmem:[#allocation10 + $0x158] sm:$0xf]
    %v2686 = vld [vmem:[#allocation10 + $0x15c] sm:$0xf]
    %v2687 = vld [vmem:[#allocation10 + $0x160] sm:$0xf]
    %v2688 = vld [vmem:[#allocation10 + $0x164] sm:$0xf]
    %v2689 = vld [vmem:[#allocation10 + $0x168] sm:$0xf]
    %v2690 = vld [vmem:[#allocation10 + $0x16c] sm:$0xf]
    %v2691 = vld [vmem:[#allocation10 + $0x170] sm:$0xf]
    %v2692 = vld [vmem:[#allocation10 + $0x174] sm:$0xf]
    %v2693 = vld [vmem:[#allocation10 + $0x178] sm:$0xf]
    %v2694 = vld [vmem:[#allocation10 + $0x17c] sm:$0xf]
    %v2695 = vld [vmem:[#allocation10 + $0x180] sm:$0xf]
    %v2696 = vld [vmem:[#allocation10 + $0x184] sm:$0xf]
    %v2697 = vld [vmem:[#allocation10 + $0x188] sm:$0xf]
    %v2698 = vld [vmem:[#allocation10 + $0x18c] sm:$0xf]
    %v2699 = vld [vmem:[#allocation10 + $0x190] sm:$0xf]
    %v2700 = vld [vmem:[#allocation10 + $0x194] sm:$0xf]
    %v2701 = vld [vmem:[#allocation10 + $0x198] sm:$0xf]
    %v2702 = vld [vmem:[#allocation10 + $0x19c] sm:$0xf]
    %v2703 = vld [vmem:[#allocation10 + $0x1a0] sm:$0xf]
    %v2704 = vld [vmem:[#allocation10 + $0x1a4] sm:$0xf]
    %v2705 = vld [vmem:[#allocation10 + $0x1a8] sm:$0xf]
    %v2706 = vld [vmem:[#allocation10 + $0x1ac] sm:$0xf]
    %v2707 = vld [vmem:[#allocation10 + $0x1b0] sm:$0xf]
    %v2708 = vld [vmem:[#allocation10 + $0x1b4] sm:$0xf]
    %v2709 = vld [vmem:[#allocation10 + $0x1b8] sm:$0xf]
    %v2710 = vld [vmem:[#allocation10 + $0x1bc] sm:$0xf]
    %v2711 = vld [vmem:[#allocation10 + $0x1c0] sm:$0xf]
    %v2712 = vld [vmem:[#allocation10 + $0x1c4] sm:$0xf]
    %v2713 = vld [vmem:[#allocation10 + $0x1c8] sm:$0xf]
    %v2714 = vld [vmem:[#allocation10 + $0x1cc] sm:$0xf]
    %v2715 = vld [vmem:[#allocation10 + $0x1d0] sm:$0xf]
    %v2716 = vld [vmem:[#allocation10 + $0x1d4] sm:$0xf]
    %v2717 = vld [vmem:[#allocation10 + $0x1d8] sm:$0xf]
    %v2718 = vld [vmem:[#allocation10 + $0x1dc] sm:$0xf]
    %v2719 = vld [vmem:[#allocation10 + $0x1e0] sm:$0xf]
    %v2720 = vld [vmem:[#allocation10 + $0x1e4] sm:$0xf]
    %v2721 = vld [vmem:[#allocation10 + $0x1e8] sm:$0xf]
    %v2722 = vld [vmem:[#allocation10 + $0x1ec] sm:$0xf]
    %v2723 = vld [vmem:[#allocation10 + $0x1f0] sm:$0xf]
    %v2724 = vld [vmem:[#allocation10 + $0x1f4] sm:$0xf]
    %v2725 = vld [vmem:[#allocation10 + $0x1f8] sm:$0xf]
    %v2726 = vld [vmem:[#allocation10 + $0x1fc] sm:$0xf]
    %v2727 = vlaneseq
    %v2728 = vshrl.u32 %v2727, 7
    %v2729 = vsub.s32 3, %v2728
    %v2730 = vrot.slane %v117, %v2729
    %v2859 = vunpack.c.l.b16 %v2599
    %v2860 = vunpack.c.l.b16 %v2600
    %v2861 = vunpack.c.l.b16 %v2601
    %v2862 = vunpack.c.l.b16 %v2602
    %v2863 = vunpack.c.l.b16 %v2603
    %v2864 = vunpack.c.l.b16 %v2604
    %v2865 = vunpack.c.l.b16 %v2605
    %v2866 = vunpack.c.l.b16 %v2606
    %v2867 = vunpack.c.l.b16 %v2607
    %v2868 = vunpack.c.l.b16 %v2608
    %v2869 = vunpack.c.l.b16 %v2609
    %v2870 = vunpack.c.l.b16 %v2610
    %v2871 = vunpack.c.l.b16 %v2611
    %v2872 = vunpack.c.l.b16 %v2612
    %v2873 = vunpack.c.l.b16 %v2613
    %v2874 = vunpack.c.l.b16 %v2614
    %v2875 = vunpack.c.l.b16 %v2615
    %v2876 = vunpack.c.l.b16 %v2616
    %v2877 = vunpack.c.l.b16 %v2617
    %v2878 = vunpack.c.l.b16 %v2618
    %v2879 = vunpack.c.l.b16 %v2619
    %v2880 = vunpack.c.l.b16 %v2620
    %v2881 = vunpack.c.l.b16 %v2621
    %v2882 = vunpack.c.l.b16 %v2622
    %v2883 = vunpack.c.l.b16 %v2623
    %v2884 = vunpack.c.l.b16 %v2624
    %v2885 = vunpack.c.l.b16 %v2625
    %v2886 = vunpack.c.l.b16 %v2626
    %v2887 = vunpack.c.l.b16 %v2627
    %v2888 = vunpack.c.l.b16 %v2628
    %v2889 = vunpack.c.l.b16 %v2629
    %v2890 = vunpack.c.l.b16 %v2630
    %v2891 = vunpack.c.l.b16 %v2631
    %v2892 = vunpack.c.l.b16 %v2632
    %v2893 = vunpack.c.l.b16 %v2633
    %v2894 = vunpack.c.l.b16 %v2634
    %v2895 = vunpack.c.l.b16 %v2635
    %v2896 = vunpack.c.l.b16 %v2636
    %v2897 = vunpack.c.l.b16 %v2637
    %v2898 = vunpack.c.l.b16 %v2638
    %v2899 = vunpack.c.l.b16 %v2639
    %v2900 = vunpack.c.l.b16 %v2640
    %v2901 = vunpack.c.l.b16 %v2641
    %v2902 = vunpack.c.l.b16 %v2642
    %v2903 = vunpack.c.l.b16 %v2643
    %v2904 = vunpack.c.l.b16 %v2644
    %v2905 = vunpack.c.l.b16 %v2645
    %v2906 = vunpack.c.l.b16 %v2646
    %v2907 = vunpack.c.l.b16 %v2647
    %v2908 = vunpack.c.l.b16 %v2648
    %v2909 = vunpack.c.l.b16 %v2649
    %v2910 = vunpack.c.l.b16 %v2650
    %v2911 = vunpack.c.l.b16 %v2651
    %v2912 = vunpack.c.l.b16 %v2652
    %v2913 = vunpack.c.l.b16 %v2653
    %v2914 = vunpack.c.l.b16 %v2654
    %v2915 = vunpack.c.l.b16 %v2655
    %v2916 = vunpack.c.l.b16 %v2656
    %v2917 = vunpack.c.l.b16 %v2657
    %v2918 = vunpack.c.l.b16 %v2658
    %v2919 = vunpack.c.l.b16 %v2659
    %v2920 = vunpack.c.l.b16 %v2660
    %v2921 = vunpack.c.l.b16 %v2661
    %v2922 = vunpack.c.l.b16 %v2662
    %v2923 = vunpack.c.l.b16 %v2663
    %v2924 = vunpack.c.l.b16 %v2664
    %v2925 = vunpack.c.l.b16 %v2665
    %v2926 = vunpack.c.l.b16 %v2666
    %v2927 = vunpack.c.l.b16 %v2667
    %v2928 = vunpack.c.l.b16 %v2668
    %v2929 = vunpack.c.l.b16 %v2669
    %v2930 = vunpack.c.l.b16 %v2670
    %v2931 = vunpack.c.l.b16 %v2671
    %v2932 = vunpack.c.l.b16 %v2672
    %v2933 = vunpack.c.l.b16 %v2673
    %v2934 = vunpack.c.l.b16 %v2674
    %v2935 = vunpack.c.l.b16 %v2675
    %v2936 = vunpack.c.l.b16 %v2676
    %v2937 = vunpack.c.l.b16 %v2677
    %v2938 = vunpack.c.l.b16 %v2678
    %v2939 = vunpack.c.l.b16 %v2679
    %v2940 = vunpack.c.l.b16 %v2680
    %v2941 = vunpack.c.l.b16 %v2681
    %v2942 = vunpack.c.l.b16 %v2682
    %v2943 = vunpack.c.l.b16 %v2683
    %v2944 = vunpack.c.l.b16 %v2684
    %v2945 = vunpack.c.l.b16 %v2685
    %v2946 = vunpack.c.l.b16 %v2686
    %v2947 = vunpack.c.l.b16 %v2687
    %v2948 = vunpack.c.l.b16 %v2688
    %v2949 = vunpack.c.l.b16 %v2689
    %v2950 = vunpack.c.l.b16 %v2690
    %v2951 = vunpack.c.l.b16 %v2691
    %v2952 = vunpack.c.l.b16 %v2692
    %v2953 = vunpack.c.l.b16 %v2693
    %v2954 = vunpack.c.l.b16 %v2694
    %v2955 = vunpack.c.l.b16 %v2695
    %v2956 = vunpack.c.l.b16 %v2696
    %v2957 = vunpack.c.l.b16 %v2697
    %v2958 = vunpack.c.l.b16 %v2698
    %v2959 = vunpack.c.l.b16 %v2699
    %v2960 = vunpack.c.l.b16 %v2700
    %v2961 = vunpack.c.l.b16 %v2701
    %v2962 = vunpack.c.l.b16 %v2702
    %v2963 = vunpack.c.l.b16 %v2703
    %v2964 = vunpack.c.l.b16 %v2704
    %v2965 = vunpack.c.l.b16 %v2705
    %v2966 = vunpack.c.l.b16 %v2706
    %v2967 = vunpack.c.l.b16 %v2707
    %v2968 = vunpack.c.l.b16 %v2708
    %v2969 = vunpack.c.l.b16 %v2709
    %v2970 = vunpack.c.l.b16 %v2710
    %v2971 = vunpack.c.l.b16 %v2711
    %v2972 = vunpack.c.l.b16 %v2712
    %v2973 = vunpack.c.l.b16 %v2713
    %v2974 = vunpack.c.l.b16 %v2714
    %v2975 = vunpack.c.l.b16 %v2715
    %v2976 = vunpack.c.l.b16 %v2716
    %v2977 = vunpack.c.l.b16 %v2717
    %v2978 = vunpack.c.l.b16 %v2718
    %v2979 = vunpack.c.l.b16 %v2719
    %v2980 = vunpack.c.l.b16 %v2720
    %v2981 = vunpack.c.l.b16 %v2721
    %v2982 = vunpack.c.l.b16 %v2722
    %v2983 = vunpack.c.l.b16 %v2723
    %v2984 = vunpack.c.l.b16 %v2724
    %v2985 = vunpack.c.l.b16 %v2725
    %v2986 = vunpack.c.l.b16 %v2726
    %v2987 = vpack.c.b16 %v2860, %v2859
    %v2988 = vpack.c.b16 %v2862, %v2861
    %v2989 = vpack.c.b16 %v2864, %v2863
    %v2990 = vpack.c.b16 %v2866, %v2865
    %v2991 = vpack.c.b16 %v2868, %v2867
    %v2992 = vpack.c.b16 %v2870, %v2869
    %v2993 = vpack.c.b16 %v2872, %v2871
    %v2994 = vpack.c.b16 %v2874, %v2873
    %v2995 = vpack.c.b16 %v2876, %v2875
    %v2996 = vpack.c.b16 %v2878, %v2877
    %v2997 = vpack.c.b16 %v2880, %v2879
    %v2998 = vpack.c.b16 %v2882, %v2881
    %v2999 = vpack.c.b16 %v2884, %v2883
    %v3000 = vpack.c.b16 %v2886, %v2885
    %v3001 = vpack.c.b16 %v2888, %v2887
    %v3002 = vpack.c.b16 %v2890, %v2889
    %v3003 = vpack.c.b16 %v2892, %v2891
    %v3004 = vpack.c.b16 %v2894, %v2893
    %v3005 = vpack.c.b16 %v2896, %v2895
    %v3006 = vpack.c.b16 %v2898, %v2897
    %v3007 = vpack.c.b16 %v2900, %v2899
    %v3008 = vpack.c.b16 %v2902, %v2901
    %v3009 = vpack.c.b16 %v2904, %v2903
    %v3010 = vpack.c.b16 %v2906, %v2905
    %v3011 = vpack.c.b16 %v2908, %v2907
    %v3012 = vpack.c.b16 %v2910, %v2909
    %v3013 = vpack.c.b16 %v2912, %v2911
    %v3014 = vpack.c.b16 %v2914, %v2913
    %v3015 = vpack.c.b16 %v2916, %v2915
    %v3016 = vpack.c.b16 %v2918, %v2917
    %v3017 = vpack.c.b16 %v2920, %v2919
    %v3018 = vpack.c.b16 %v2922, %v2921
    %v3019 = vpack.c.b16 %v2924, %v2923
    %v3020 = vpack.c.b16 %v2926, %v2925
    %v3021 = vpack.c.b16 %v2928, %v2927
    %v3022 = vpack.c.b16 %v2930, %v2929
    %v3023 = vpack.c.b16 %v2932, %v2931
    %v3024 = vpack.c.b16 %v2934, %v2933
    %v3025 = vpack.c.b16 %v2936, %v2935
    %v3026 = vpack.c.b16 %v2938, %v2937
    %v3027 = vpack.c.b16 %v2940, %v2939
    %v3028 = vpack.c.b16 %v2942, %v2941
    %v3029 = vpack.c.b16 %v2944, %v2943
    %v3030 = vpack.c.b16 %v2946, %v2945
    %v3031 = vpack.c.b16 %v2948, %v2947
    %v3032 = vpack.c.b16 %v2950, %v2949
    %v3033 = vpack.c.b16 %v2952, %v2951
    %v3034 = vpack.c.b16 %v2954, %v2953
    %v3035 = vpack.c.b16 %v2956, %v2955
    %v3036 = vpack.c.b16 %v2958, %v2957
    %v3037 = vpack.c.b16 %v2960, %v2959
    %v3038 = vpack.c.b16 %v2962, %v2961
    %v3039 = vpack.c.b16 %v2964, %v2963
    %v3040 = vpack.c.b16 %v2966, %v2965
    %v3041 = vpack.c.b16 %v2968, %v2967
    %v3042 = vpack.c.b16 %v2970, %v2969
    %v3043 = vpack.c.b16 %v2972, %v2971
    %v3044 = vpack.c.b16 %v2974, %v2973
    %v3045 = vpack.c.b16 %v2976, %v2975
    %v3046 = vpack.c.b16 %v2978, %v2977
    %v3047 = vpack.c.b16 %v2980, %v2979
    %v3048 = vpack.c.b16 %v2982, %v2981
    %v3049 = vpack.c.b16 %v2984, %v2983
    %v3050 = vpack.c.b16 %v2986, %v2985
    %3115 = vmatprep.subr.bf16.mxu0 0
    %3116 = vmatpush1.bf16.msra.mxu0 %v2987
    %3117 = vmatprep.subr.bf16.mxu0 0
    %3118 = vmatpush1.bf16.msra.mxu0 %v2988
    %3119 = vmatprep.subr.bf16.mxu0 0
    %3120 = vmatpush1.bf16.msra.mxu0 %v2989
    %3121 = vmatprep.subr.bf16.mxu0 0
    %3122 = vmatpush1.bf16.msra.mxu0 %v2990
    %3123 = vmatprep.subr.bf16.mxu0 0
    %3124 = vmatpush1.bf16.msra.mxu0 %v2991
    %3125 = vmatprep.subr.bf16.mxu0 0
    %3126 = vmatpush1.bf16.msra.mxu0 %v2992
    %3127 = vmatprep.subr.bf16.mxu0 0
    %3128 = vmatpush1.bf16.msra.mxu0 %v2993
    %3129 = vmatprep.subr.bf16.mxu0 0
    %3130 = vmatpush1.bf16.msra.mxu0 %v2994
    %3131 = vmatprep.subr.bf16.mxu0 0
    %3132 = vmatpush1.bf16.msra.mxu0 %v2995
    %3133 = vmatprep.subr.bf16.mxu0 0
    %3134 = vmatpush1.bf16.msra.mxu0 %v2996
    %3135 = vmatprep.subr.bf16.mxu0 0
    %3136 = vmatpush1.bf16.msra.mxu0 %v2997
    %3137 = vmatprep.subr.bf16.mxu0 0
    %3138 = vmatpush1.bf16.msra.mxu0 %v2998
    %3139 = vmatprep.subr.bf16.mxu0 0
    %3140 = vmatpush1.bf16.msra.mxu0 %v2999
    %3141 = vmatprep.subr.bf16.mxu0 0
    %3142 = vmatpush1.bf16.msra.mxu0 %v3000
    %3143 = vmatprep.subr.bf16.mxu0 0
    %3144 = vmatpush1.bf16.msra.mxu0 %v3001
    %3145 = vmatprep.subr.bf16.mxu0 0
    %3146 = vmatpush1.bf16.msra.mxu0 %v3002
    %3147 = vmatprep.mubr.bf16.mxu0 %v2592
    %3148 = vmatmul.mubr.bf16.gmra.mrb[0].mxu0 %v2591
    %v3149 = vpop.f32.mrb[0].mxu0
    %v3150 = vadd.f32 %v2730, %v3149
    %v3151 = vpop.f32.mrb[0].mxu0
    %v3152 = vpop.f32.mrb[0].mxu0
    %v3153 = vpop.f32.mrb[0].mxu0
    %3154 = vdwg.mxu0
    %3155 = vmatprep.subr.bf16.mxu0 0
    %3156 = vmatpush1.bf16.msra.mxu0 %v3003
    %3157 = vmatprep.subr.bf16.mxu0 0
    %3158 = vmatpush1.bf16.msra.mxu0 %v3004
    %3159 = vmatprep.subr.bf16.mxu0 0
    %3160 = vmatpush1.bf16.msra.mxu0 %v3005
    %3161 = vmatprep.subr.bf16.mxu0 0
    %3162 = vmatpush1.bf16.msra.mxu0 %v3006
    %3163 = vmatprep.subr.bf16.mxu0 0
    %3164 = vmatpush1.bf16.msra.mxu0 %v3007
    %3165 = vmatprep.subr.bf16.mxu0 0
    %3166 = vmatpush1.bf16.msra.mxu0 %v3008
    %3167 = vmatprep.subr.bf16.mxu0 0
    %3168 = vmatpush1.bf16.msra.mxu0 %v3009
    %3169 = vmatprep.subr.bf16.mxu0 0
    %3170 = vmatpush1.bf16.msra.mxu0 %v3010
    %3171 = vmatprep.subr.bf16.mxu0 0
    %3172 = vmatpush1.bf16.msra.mxu0 %v3011
    %3173 = vmatprep.subr.bf16.mxu0 0
    %3174 = vmatpush1.bf16.msra.mxu0 %v3012
    %3175 = vmatprep.subr.bf16.mxu0 0
    %3176 = vmatpush1.bf16.msra.mxu0 %v3013
    %3177 = vmatprep.subr.bf16.mxu0 0
    %3178 = vmatpush1.bf16.msra.mxu0 %v3014
    %3179 = vmatprep.subr.bf16.mxu0 0
    %3180 = vmatpush1.bf16.msra.mxu0 %v3015
    %3181 = vmatprep.subr.bf16.mxu0 0
    %3182 = vmatpush1.bf16.msra.mxu0 %v3016
    %3183 = vmatprep.subr.bf16.mxu0 0
    %3184 = vmatpush1.bf16.msra.mxu0 %v3017
    %3185 = vmatprep.subr.bf16.mxu0 0
    %3186 = vmatpush1.bf16.msra.mxu0 %v3018
    %3187 = vmatprep.mubr.bf16.mxu0 %v2594
    %3188 = vmatmul.mubr.bf16.gmra.mrb[0].mxu0 %v2593
    %v3189 = vpop.f32.mrb[0].mxu0
    %v3190 = vadd.f32 %v3150, %v3189
    %v3191 = vpop.f32.mrb[0].mxu0
    %v3192 = vpop.f32.mrb[0].mxu0
    %v3193 = vpop.f32.mrb[0].mxu0
    %3194 = vdwg.mxu0
    %3195 = vmatprep.subr.bf16.mxu0 0
    %3196 = vmatpush1.bf16.msra.mxu0 %v3019
    %3197 = vmatprep.subr.bf16.mxu0 0
    %3198 = vmatpush1.bf16.msra.mxu0 %v3020
    %3199 = vmatprep.subr.bf16.mxu0 0
    %3200 = vmatpush1.bf16.msra.mxu0 %v3021
    %3201 = vmatprep.subr.bf16.mxu0 0
    %3202 = vmatpush1.bf16.msra.mxu0 %v3022
    %3203 = vmatprep.subr.bf16.mxu0 0
    %3204 = vmatpush1.bf16.msra.mxu0 %v3023
    %3205 = vmatprep.subr.bf16.mxu0 0
    %3206 = vmatpush1.bf16.msra.mxu0 %v3024
    %3207 = vmatprep.subr.bf16.mxu0 0
    %3208 = vmatpush1.bf16.msra.mxu0 %v3025
    %3209 = vmatprep.subr.bf16.mxu0 0
    %3210 = vmatpush1.bf16.msra.mxu0 %v3026
    %3211 = vmatprep.subr.bf16.mxu0 0
    %3212 = vmatpush1.bf16.msra.mxu0 %v3027
    %3213 = vmatprep.subr.bf16.mxu0 0
    %3214 = vmatpush1.bf16.msra.mxu0 %v3028
    %3215 = vmatprep.subr.bf16.mxu0 0
    %3216 = vmatpush1.bf16.msra.mxu0 %v3029
    %3217 = vmatprep.subr.bf16.mxu0 0
    %3218 = vmatpush1.bf16.msra.mxu0 %v3030
    %3219 = vmatprep.subr.bf16.mxu0 0
    %3220 = vmatpush1.bf16.msra.mxu0 %v3031
    %3221 = vmatprep.subr.bf16.mxu0 0
    %3222 = vmatpush1.bf16.msra.mxu0 %v3032
    %3223 = vmatprep.subr.bf16.mxu0 0
    %3224 = vmatpush1.bf16.msra.mxu0 %v3033
    %3225 = vmatprep.subr.bf16.mxu0 0
    %3226 = vmatpush1.bf16.msra.mxu0 %v3034
    %3227 = vmatprep.mubr.bf16.mxu0 %v2596
    %3228 = vmatmul.mubr.bf16.gmra.mrb[0].mxu0 %v2595
    %v3229 = vpop.f32.mrb[0].mxu0
    %v3230 = vadd.f32 %v3190, %v3229
    %v3231 = vpop.f32.mrb[0].mxu0
    %v3232 = vpop.f32.mrb[0].mxu0
    %v3233 = vpop.f32.mrb[0].mxu0
    %3234 = vdwg.mxu0
    %3235 = vmatprep.subr.bf16.mxu0 0
    %3236 = vmatpush1.bf16.msra.mxu0 %v3035
    %3237 = vmatprep.subr.bf16.mxu0 0
    %3238 = vmatpush1.bf16.msra.mxu0 %v3036
    %3239 = vmatprep.subr.bf16.mxu0 0
    %3240 = vmatpush1.bf16.msra.mxu0 %v3037
    %3241 = vmatprep.subr.bf16.mxu0 0
    %3242 = vmatpush1.bf16.msra.mxu0 %v3038
    %3243 = vmatprep.subr.bf16.mxu0 0
    %3244 = vmatpush1.bf16.msra.mxu0 %v3039
    %3245 = vmatprep.subr.bf16.mxu0 0
    %3246 = vmatpush1.bf16.msra.mxu0 %v3040
    %3247 = vmatprep.subr.bf16.mxu0 0
    %3248 = vmatpush1.bf16.msra.mxu0 %v3041
    %3249 = vmatprep.subr.bf16.mxu0 0
    %3250 = vmatpush1.bf16.msra.mxu0 %v3042
    %3251 = vmatprep.subr.bf16.mxu0 0
    %3252 = vmatpush1.bf16.msra.mxu0 %v3043
    %3253 = vmatprep.subr.bf16.mxu0 0
    %3254 = vmatpush1.bf16.msra.mxu0 %v3044
    %3255 = vmatprep.subr.bf16.mxu0 0
    %3256 = vmatpush1.bf16.msra.mxu0 %v3045
    %3257 = vmatprep.subr.bf16.mxu0 0
    %3258 = vmatpush1.bf16.msra.mxu0 %v3046
    %3259 = vmatprep.subr.bf16.mxu0 0
    %3260 = vmatpush1.bf16.msra.mxu0 %v3047
    %3261 = vmatprep.subr.bf16.mxu0 0
    %3262 = vmatpush1.bf16.msra.mxu0 %v3048
    %3263 = vmatprep.subr.bf16.mxu0 0
    %3264 = vmatpush1.bf16.msra.mxu0 %v3049
    %3265 = vmatprep.subr.bf16.mxu0 0
    %3266 = vmatpush1.bf16.msra.mxu0 %v3050
    %3267 = vmatprep.mubr.bf16.mxu0 %v2598
    %3268 = vmatmul.mubr.bf16.gmra.mrb[0].mxu0 %v2597
    %v3269 = vpop.f32.mrb[0].mxu0
    %v3270 = vadd.f32 %v3230, %v3269
    %v3271 = vpop.f32.mrb[0].mxu0
    %v3272 = vpop.f32.mrb[0].mxu0
    %v3273 = vpop.f32.mrb[0].mxu0
    %3274 = vdwg.mxu0
    %v3275 = vmax.f32 %v3270, 0.0
    %v3276 = vpack.c.bf16 %v3275, %v3275
    %v3277 = vld [vmem:[#allocation11] sm:$0xf]
    %v3278 = vld [vmem:[#allocation11 + $0x4] sm:$0xf]
    %v3279 = vld [vmem:[#allocation11 + $0x8] sm:$0xf]
    %v3280 = vld [vmem:[#allocation11 + $0xc] sm:$0xf]
    %v3281 = vld [vmem:[#allocation11 + $0x10] sm:$0xf]
    %v3282 = vld [vmem:[#allocation11 + $0x14] sm:$0xf]
    %v3283 = vld [vmem:[#allocation11 + $0x18] sm:$0xf]
    %v3284 = vld [vmem:[#allocation11 + $0x1c] sm:$0xf]
    %v3285 = vld [vmem:[#allocation11 + $0x20] sm:$0xf]
    %v3286 = vld [vmem:[#allocation11 + $0x24] sm:$0xf]
    %v3287 = vld [vmem:[#allocation11 + $0x28] sm:$0xf]
    %v3288 = vld [vmem:[#allocation11 + $0x2c] sm:$0xf]
    %v3289 = vld [vmem:[#allocation11 + $0x30] sm:$0xf]
    %v3290 = vld [vmem:[#allocation11 + $0x34] sm:$0xf]
    %v3291 = vld [vmem:[#allocation11 + $0x38] sm:$0xf]
    %v3292 = vld [vmem:[#allocation11 + $0x3c] sm:$0xf]
    %v3293 = vlaneseq
    %v3294 = vshrl.u32 %v3293, 7
    %v3295 = vsub.s32 4, %v3294
    %v3296 = vrot.slane %v117, %v3295
    %v3313 = vunpack.c.l.b16 %v3277
    %v3314 = vunpack.c.l.b16 %v3278
    %v3315 = vunpack.c.l.b16 %v3279
    %v3316 = vunpack.c.l.b16 %v3280
    %v3317 = vunpack.c.l.b16 %v3281
    %v3318 = vunpack.c.l.b16 %v3282
    %v3319 = vunpack.c.l.b16 %v3283
    %v3320 = vunpack.c.l.b16 %v3284
    %v3321 = vunpack.c.l.b16 %v3285
    %v3322 = vunpack.c.l.b16 %v3286
    %v3323 = vunpack.c.l.b16 %v3287
    %v3324 = vunpack.c.l.b16 %v3288
    %v3325 = vunpack.c.l.b16 %v3289
    %v3326 = vunpack.c.l.b16 %v3290
    %v3327 = vunpack.c.l.b16 %v3291
    %v3328 = vunpack.c.l.b16 %v3292
    %v3329 = vpack.c.b16 %v3314, %v3313
    %v3330 = vpack.c.b16 %v3316, %v3315
    %v3331 = vpack.c.b16 %v3318, %v3317
    %v3332 = vpack.c.b16 %v3320, %v3319
    %v3333 = vpack.c.b16 %v3322, %v3321
    %v3334 = vpack.c.b16 %v3324, %v3323
    %v3335 = vpack.c.b16 %v3326, %v3325
    %v3336 = vpack.c.b16 %v3328, %v3327
    %3345 = vmatprep.subr.bf16.mxu0 0
    %3346 = vmatpush1.bf16.msra.mxu0 %v3329
    %3347 = vmatprep.subr.bf16.mxu0 0
    %3348 = vmatpush1.bf16.msra.mxu0 %v3330
    %3349 = vmatprep.subr.bf16.mxu0 0
    %3350 = vmatpush1.bf16.msra.mxu0 %v3331
    %3351 = vmatprep.subr.bf16.mxu0 0
    %3352 = vmatpush1.bf16.msra.mxu0 %v3332
    %3353 = vmatprep.subr.bf16.mxu0 0
    %3354 = vmatpush1.bf16.msra.mxu0 %v3333
    %3355 = vmatprep.subr.bf16.mxu0 0
    %3356 = vmatpush1.bf16.msra.mxu0 %v3334
    %3357 = vmatprep.subr.bf16.mxu0 0
    %3358 = vmatpush1.bf16.msra.mxu0 %v3335
    %3359 = vmatprep.subr.bf16.mxu0 0
    %3360 = vmatpush1.bf16.msra.mxu0 %v3336
    %3361 = vmatprep.subr.bf16.mxu0 0
    %3362 = vmatpush1.bf16.msra.mxu0 0
    %3363 = vmatprep.subr.bf16.mxu0 0
    %3364 = vmatpush1.bf16.msra.mxu0 0
    %3365 = vmatprep.subr.bf16.mxu0 0
    %3366 = vmatpush1.bf16.msra.mxu0 0
    %3367 = vmatprep.subr.bf16.mxu0 0
    %3368 = vmatpush1.bf16.msra.mxu0 0
    %3369 = vmatprep.subr.bf16.mxu0 0
    %3370 = vmatpush1.bf16.msra.mxu0 0
    %3371 = vmatprep.subr.bf16.mxu0 0
    %3372 = vmatpush1.bf16.msra.mxu0 0
    %3373 = vmatprep.subr.bf16.mxu0 0
    %3374 = vmatpush1.bf16.msra.mxu0 0
    %3375 = vmatprep.subr.bf16.mxu0 0
    %3376 = vmatpush1.bf16.msra.mxu0 0
    %3377 = vmatprep.mubr.bf16.mxu0 0
    %3378 = vmatmul.mubr.bf16.gmra.mrb[0].mxu0 %v3276
    %v3379 = vpop.f32.mrb[0].mxu0
    %v3380 = vadd.f32 %v3296, %v3379
    %v3381 = vpop.f32.mrb[0].mxu0
    %v3382 = vpop.f32.mrb[0].mxu0
    %v3383 = vpop.f32.mrb[0].mxu0
    %3384 = vdwg.mxu0
    %3385 = vst [vmem:[#allocation14] sm:$0xff] %v3380
    // Predicated region
    $region58: #{tpu_custom_call.1} parent=1 // pred_check
      _
    $region59: #{tpu_custom_call.1} parent=1 // pred_check_branch
      %3387 = sbr.rel (0) target = $region61
    $region60: #{tpu_custom_call.1} parent=1 // pred_region
      %s3389 = ssub.s32 128, 128
      %3390 = vsyncadd [#allocation4], %s3389
      %s3392 = sshll.u32 [#allocation14], 4
      %s3393 = int_to_ptr.vmem [resolvable:$true] %s3392
      %3395 = dma.vmem_to_hbm [thread:$0]  %s3393, 128, %s7, [#allocation4]
    $region61: #{tpu_custom_call.1} parent=1 // pred_fallthru
      _
    // Predicated region
    $region62: #{tpu_custom_call.1} parent=1 // pred_check
      _
    $region63: #{tpu_custom_call.1} parent=1 // pred_check_branch
      %3397 = sbr.rel (0) target = $region65
    $region64: #{tpu_custom_call.1} parent=1 // pred_region
      %3398 = dma.done [#allocation4], 128
    $region65: #{tpu_custom_call.1} parent=1 // pred_fallthru
      _
    %3399 = vsyncpa [#allocation3], 1
    %3400 = vsyncpa [#allocation6], 1
    %3401 = vsyncpa [#allocation9], 1
    %3402 = vsyncpa [#allocation12], 1
    %3403 = vsyncpa [#allocation4], 1

</llo_original>
